<compile_context>
chip_gen: v5e
topology: v5e:2x2
jax: 0.10.0
libtpu: 0.0.40
codegen_flags: <defaults>
</compile_context>

<pallas_src>
import functools

import jax
import jax.numpy as jnp
from jax.experimental import pallas as pl
from jax.experimental.pallas import tpu as pltpu


def _round_up(n, m):
    return ((n + m - 1) // m) * m


# ---------------------------------------------------------------------------
# Kernel helpers
# ---------------------------------------------------------------------------

def _mlp_branch(x_f32, w1_ref, b1_ref, w2_ref, b2_ref):
    """Linear -> ReLU -> Linear with bf16 MXU inputs and f32 accumulation."""
    h = jnp.dot(x_f32.astype(jnp.bfloat16), w1_ref[...],
                preferred_element_type=jnp.float32)
    h = jnp.maximum(h + b1_ref[...], 0.0)
    o = jnp.dot(h.astype(jnp.bfloat16), w2_ref[...],
                preferred_element_type=jnp.float32)
    return o + b2_ref[...]


def _layer_norm_pieces(yc, yp, d_hid, n_pad, eps):
    """LayerNorm statistics of the (content ++ positional) row computed from
    the two lane-aligned pieces (no in-kernel concat).  Padded lanes of yc/yp
    are exactly zero; their variance contribution is removed analytically."""
    row_sum = (jnp.sum(yc, axis=-1, keepdims=True)
               + jnp.sum(yp, axis=-1, keepdims=True))
    mu = row_sum * (1.0 / d_hid)
    cc = yc - mu
    cp = yp - mu
    ssq = (jnp.sum(cc * cc, axis=-1, keepdims=True)
           + jnp.sum(cp * cp, axis=-1, keepdims=True))
    if n_pad:                                    # compile-time branch
        ssq = ssq - float(n_pad) * (mu * mu)     # padded lanes contribute mu^2
    # torch.std default is unbiased (divide by N-1); eps is added to sigma.
    sigma = jnp.sqrt(ssq * (1.0 / (d_hid - 1)))
    s = sigma + eps
    inv = pl.reciprocal(s, approx=True)
    inv = inv * (2.0 - s * inv)                  # one Newton step -> ~f32 accuracy
    return cc, cp, inv


# ---------------------------------------------------------------------------
# Kernels
# ---------------------------------------------------------------------------

def _ffn_kernel_fused(x_ref,
                      w1c_ref, b1c_ref, w2c_ref, b2c_ref,
                      w1p_ref, b1p_ref, w2p_ref, b2p_ref,
                      gamma_ref, beta_ref,
                      o_ref, *, d_content, d_hid, eps):
    """128-aligned path: one x block, one concatenated output block."""
    x = x_ref[...]                               # [TM, d_hid] f32
    xc = x[:, :d_content]                        # 128-aligned value slices
    xp = x[:, d_content:]

    yc = _mlp_branch(xc, w1c_ref, b1c_ref, w2c_ref, b2c_ref) + xc   # residual
    yp = _mlp_branch(xp, w1p_ref, b1p_ref, w2p_ref, b2p_ref) + xp

    cc, cp, inv = _layer_norm_pieces(yc, yp, d_hid, 0, eps)

    g = gamma_ref[...]
    b = beta_ref[...]
    o_ref[:, :d_content] = (cc * inv) * g[:, :d_content] + b[:, :d_content]
    o_ref[:, d_content:] = (cp * inv) * g[:, d_content:] + b[:, d_content:]


def _ffn_kernel_split(xc_ref, xp_ref,
                      w1c_ref, b1c_ref, w2c_ref, b2c_ref,
                      w1p_ref, b1p_ref, w2p_ref, b2p_ref,
                      gc_ref, bc_ref, gp_ref, bp_ref,
                      oc_ref, op_ref, *, d_content, d_positional, d_hid, eps):
    """Padded path for non-128-aligned feature splits (small configs)."""
    xc = xc_ref[...]                             # [TM, dCp] f32, zero-padded lanes
    xp = xp_ref[...]                             # [TM, dPp]

    yc = _mlp_branch(xc, w1c_ref, b1c_ref, w2c_ref, b2c_ref) + xc
    yp = _mlp_branch(xp, w1p_ref, b1p_ref, w2p_ref, b2p_ref) + xp

    n_pad = (xc.shape[-1] - d_content) + (xp.shape[-1] - d_positional)
    cc, cp, inv = _layer_norm_pieces(yc, yp, d_hid, n_pad, eps)

    oc_ref[...] = (cc * inv) * gc_ref[...] + bc_ref[...]
    op_ref[...] = (cp * inv) * gp_ref[...] + bp_ref[...]


# ---------------------------------------------------------------------------
# One-time parameter preprocessing (hoisted out of the per-step wrapper)
# ---------------------------------------------------------------------------

def prepare_params(params, *, d_content):
    """Call once at model-load time.  Pads feature dims to 128 lanes where
    needed, casts matmul weights to bf16, reshapes biases / LN params to
    (1, N).  The result is reused by every `partitioned_ffn` call."""
    d_ff_half = params["w1c"].shape[1]
    d_positional = params["w1p"].shape[0]
    d_hid = d_content + d_positional
    aligned = (d_content % 128 == 0) and (d_positional % 128 == 0)
    dCp = d_content if aligned else _round_up(d_content, 128)
    dPp = d_positional if aligned else _round_up(d_positional, 128)
    dFp = _round_up(d_ff_half, 128)              # padded hidden dim -> full MXU tiles

    def pad2(w, rows, cols):
        return jnp.pad(w, ((0, rows - w.shape[0]), (0, cols - w.shape[1])))

    def pad1(v, n):
        return jnp.pad(v, (0, n - v.shape[0])).reshape(1, -1)

    prep = {
        "aligned": aligned,
        "d_content": d_content, "d_positional": d_positional, "d_hid": d_hid,
        "dCp": dCp, "dPp": dPp, "dFp": dFp,
        # bf16 weights (halved DMA, bf16 MXU inputs); padded rows/cols are zero
        "w1c": pad2(params["w1c"], dCp, dFp).astype(jnp.bfloat16),
        "w2c": pad2(params["w2c"], dFp, dCp).astype(jnp.bfloat16),
        "w1p": pad2(params["w1p"], dPp, dFp).astype(jnp.bfloat16),
        "w2p": pad2(params["w2p"], dFp, dPp).astype(jnp.bfloat16),
        # biases / LN params stay f32
        "b1c": pad1(params["b1c"], dFp),
        "b2c": pad1(params["b2c"], dCp),
        "b1p": pad1(params["b1p"], dFp),
        "b2p": pad1(params["b2p"], dPp),
    }
    if aligned:
        prep["gamma"] = params["gamma"].reshape(1, -1)
        prep["beta"] = params["beta"].reshape(1, -1)
    else:
        prep["gamma_c"] = pad1(params["gamma"][:d_content], dCp)
        prep["gamma_p"] = pad1(params["gamma"][d_content:], dPp)
        prep["beta_c"] = pad1(params["beta"][:d_content], dCp)
        prep["beta_p"] = pad1(params["beta"][d_content:], dPp)
    return prep


# ---------------------------------------------------------------------------
# Per-step wrapper
# ---------------------------------------------------------------------------

def partitioned_ffn(x, prep, *, eps=1e-3, block_tokens=512):
    """x: [T, d_hid] float32.  prep: output of prepare_params (built once)."""
    T, d_hid = x.shape
    assert d_hid == prep["d_hid"]
    d_content = prep["d_content"]
    d_positional = prep["d_positional"]
    dCp, dPp, dFp = prep["dCp"], prep["dPp"], prep["dFp"]

    # --- token tile ---
    TM = max(8, _round_up(min(block_tokens, _round_up(T, 8)), 8))
    # guarantee >=2 grid steps when there are enough tokens (megacore on v7x)
    if T >= 16 and pl.cdiv(T, TM) < 2:
        TM = max(8, _round_up(pl.cdiv(T, 2), 8))
    grid = (pl.cdiv(T, TM),)          # ragged last block is masked by Pallas

    # --- explicit VMEM budget (capped at 64 MiB: safe on v7x's 64 MiB/TC) ---
    act_bytes = 2 * TM * (dCp + dPp) * 4 * 2      # x + out tiles, double-buffered
    hid_bytes = 2 * TM * dFp * 4 * 2              # hc/hp f32 temporaries + slack
    w_bytes = 2 * (dCp + dPp) * dFp * 2 * 2       # bf16 weights (worst case 2 bufs)
    misc_bytes = 16 * (dFp + dCp + dPp) * 4
    vmem_limit = int(min(64 * 1024 * 1024,
                         max(32 * 1024 * 1024,
                             int(1.5 * (act_bytes + hid_bytes + w_bytes
                                        + misc_bytes)))))

    cost = pl.CostEstimate(
        flops=4 * T * dFp * (dCp + dPp),
        transcendentals=2 * T,
        bytes_accessed=(2 * T * d_hid * 4                 # x in + out
                        + 2 * (dCp + dPp) * dFp * 2       # bf16 weights
                        + (2 * dFp + 4 * (dCp + dPp)) * 4),
    )

    cparams = pltpu.CompilerParams(dimension_semantics=("parallel",),
                                   vmem_limit_bytes=vmem_limit)

    def run(single_buffer_pinned):
        if single_buffer_pinned:
            # grid-invariant blocks: one VMEM buffer instead of two
            pinned = lambda bs: pl.BlockSpec(bs, lambda i: (0, 0),
                                             pipeline_mode=pl.Buffered(1))
        else:
            pinned = lambda bs: pl.BlockSpec(bs, lambda i: (0, 0))
        tiled = lambda bs: pl.BlockSpec(bs, lambda i: (i, 0))

        if prep["aligned"]:
            # Copy-free path: single x input, single concatenated output.
            kernel = functools.partial(_ffn_kernel_fused, d_content=d_content,
                                       d_hid=d_hid, eps=eps)
            in_specs = [
                tiled((TM, d_hid)),
                pinned((dCp, dFp)), pinned((1, dFp)),
                pinned((dFp, dCp)), pinned((1, dCp)),
                pinned((dPp, dFp)), pinned((1, dFp)),
                pinned((dFp, dPp)), pinned((1, dPp)),
                pinned((1, d_hid)), pinned((1, d_hid)),
            ]
            return pl.pallas_call(
                kernel,
                out_shape=jax.ShapeDtypeStruct((T, d_hid), jnp.float32),
                grid=grid,
                in_specs=in_specs,
                out_specs=tiled((TM, d_hid)),
                compiler_params=cparams,
                cost_estimate=cost,
            )(x, prep["w1c"], prep["b1c"], prep["w2c"], prep["b2c"],
              prep["w1p"], prep["b1p"], prep["w2p"], prep["b2p"],
              prep["gamma"], prep["beta"])

        # Padded path for non-128-aligned feature splits: the lane padding
        # below is the only remaining per-call activation copy.
        xc = jnp.pad(x[:, :d_content], ((0, 0), (0, dCp - d_content)))
        xp = jnp.pad(x[:, d_content:], ((0, 0), (0, dPp - d_positional)))
        kernel = functools.partial(_ffn_kernel_split, d_content=d_content,
                                   d_positional=d_positional, d_hid=d_hid,
                                   eps=eps)
        in_specs = [
            tiled((TM, dCp)), tiled((TM, dPp)),
            pinned((dCp, dFp)), pinned((1, dFp)),
            pinned((dFp, dCp)), pinned((1, dCp)),
            pinned((dPp, dFp)), pinned((1, dFp)),
            pinned((dFp, dPp)), pinned((1, dPp)),
            pinned((1, dCp)), pinned((1, dCp)),
            pinned((1, dPp)), pinned((1, dPp)),
        ]
        out_c, out_p = pl.pallas_call(
            kernel,
            out_shape=(jax.ShapeDtypeStruct((T, dCp), jnp.float32),
                       jax.ShapeDtypeStruct((T, dPp), jnp.float32)),
            grid=grid,
            in_specs=in_specs,
            out_specs=(tiled((TM, dCp)), tiled((TM, dPp))),
            compiler_params=cparams,
            cost_estimate=cost,
        )(xc, xp, prep["w1c"], prep["b1c"], prep["w2c"], prep["b2c"],
          prep["w1p"], prep["b1p"], prep["w2p"], prep["b2p"],
          prep["gamma_c"], prep["beta_c"], prep["gamma_p"], prep["beta_p"])
        return jnp.concatenate(
            [out_c[:, :d_content], out_p[:, :d_positional]], axis=-1)

    try:
        return run(single_buffer_pinned=True)
    except Exception:
        # pl.Buffered(1) unsupported in this Pallas build -> default buffering
        return run(single_buffer_pinned=False)


# ---------------------------------------------------------------------------
# Parameters / reference (pure JAX, f32)
# ---------------------------------------------------------------------------

def init_params(key, d_hid, d_ff, d_positional):
    d_content = d_hid - d_positional
    d_ff_half = d_ff // 2
    keys = jax.random.split(key, 8)
    scale = 0.02
    # weights stored [in, out] (transposed vs torch.nn.Linear)
    return {
        "w1c": scale * jax.random.normal(keys[0], (d_content, d_ff_half), jnp.float32),
        "b1c": scale * jax.random.normal(keys[1], (d_ff_half,), jnp.float32),
        "w2c": scale * jax.random.normal(keys[2], (d_ff_half, d_content), jnp.float32),
        "b2c": scale * jax.random.normal(keys[3], (d_content,), jnp.float32),
        "w1p": scale * jax.random.normal(keys[4], (d_positional, d_ff_half), jnp.float32),
        "b1p": scale * jax.random.normal(keys[5], (d_ff_half,), jnp.float32),
        "w2p": scale * jax.random.normal(keys[6], (d_ff_half, d_positional), jnp.float32),
        "b2p": scale * jax.random.normal(keys[7], (d_positional,), jnp.float32),
        "gamma": jnp.ones((d_hid,), jnp.float32),
        "beta": jnp.zeros((d_hid,), jnp.float32),
    }


def reference_forward(x, params, *, d_content, eps=1e-3):
    """Pure-JAX f32 reference mirroring the PyTorch forward (eval mode)."""
    xc = x[:, :d_content]
    xp = x[:, d_content:]
    oc = jnp.maximum(xc @ params["w1c"] + params["b1c"], 0.0) @ params["w2c"] + params["b2c"]
    op = jnp.maximum(xp @ params["w1p"] + params["b1p"], 0.0) @ params["w2p"] + params["b2p"]
    out = jnp.concatenate([oc, op], axis=-1) + x
    mu = jnp.mean(out, axis=-1, keepdims=True)
    sigma = jnp.std(out, axis=-1, keepdims=True, ddof=1)  # unbiased, like torch.std
    ln = (out - mu) / (sigma + eps)
    return ln * params["gamma"] + params["beta"]


if __name__ == "__main__":
    def run_case(key, T, d_hid, d_ff, d_positional):
        d_content = d_hid - d_positional
        kx, kp = jax.random.split(key)
        x = jax.random.normal(kx, (T, d_hid), jnp.float32)
        params = init_params(kp, d_hid, d_ff, d_positional)
        prep = prepare_params(params, d_content=d_content)   # one-time prep
        out = jax.block_until_ready(partitioned_ffn(x, prep))
        ref = reference_forward(x, params, d_content=d_content)
        assert out.shape == (T, d_hid)
        err = float(jnp.max(jnp.abs(out - ref)))
        # tolerance accounts for bf16 matmul inputs (elementwise/LN math is f32)
        assert jnp.allclose(out, ref, atol=3e-3, rtol=3e-3), \
            f"mismatch vs reference (max abs err {err:.2e})"

    k1, k2 = jax.random.split(jax.random.PRNGKey(0))
    # small non-128-aligned config (padded path): 8 tokens, d_hid=32,
    # d_positional=8 (d_content=24), d_ff=32 (d_ff//2=16)
    run_case(k1, T=8, d_hid=32, d_ff=32, d_positional=8)
    # small 128-aligned config (copy-free fused path, 2-step ragged token grid):
    # 40 tokens, d_hid=256, d_positional=128, d_ff=256
    run_case(k2, T=40, d_hid=256, d_ff=256, d_positional=128)
    print("KERNEL_OK")
</pallas_src>

<mosaic_0001>
module attributes {stable_mosaic.version = 11 : i64} {
  func.func @_ffn_kernel_split(%arg0: i32, %arg1: memref<8x128xf32, #tpu.memory_space<vmem>>, %arg2: memref<8x128xf32, #tpu.memory_space<vmem>>, %arg3: memref<128x128xbf16, #tpu.memory_space<vmem>>, %arg4: memref<1x128xf32, #tpu.memory_space<vmem>>, %arg5: memref<128x128xbf16, #tpu.memory_space<vmem>>, %arg6: memref<1x128xf32, #tpu.memory_space<vmem>>, %arg7: memref<128x128xbf16, #tpu.memory_space<vmem>>, %arg8: memref<1x128xf32, #tpu.memory_space<vmem>>, %arg9: memref<128x128xbf16, #tpu.memory_space<vmem>>, %arg10: memref<1x128xf32, #tpu.memory_space<vmem>>, %arg11: memref<1x128xf32, #tpu.memory_space<vmem>>, %arg12: memref<1x128xf32, #tpu.memory_space<vmem>>, %arg13: memref<1x128xf32, #tpu.memory_space<vmem>>, %arg14: memref<1x128xf32, #tpu.memory_space<vmem>>, %arg15: memref<8x128xf32, #tpu.memory_space<vmem>>, %arg16: memref<8x128xf32, #tpu.memory_space<vmem>>) attributes {dimension_semantics = [#tpu.dimension_semantics<parallel>], iteration_bounds = array<i64: 1>, scalar_prefetch = 0 : i64, scratch_operands = 0 : i64, tpu.core_type = #tpu.core_type<tc>, window_params = [{transform_indices = @transform_0, window_bounds = array<i64: 8, 128>}, {transform_indices = @transform_1, window_bounds = array<i64: 8, 128>}, {pipeline_mode = #tpu.pipeline_mode<synchronous>, transform_indices = @transform_2, window_bounds = array<i64: 128, 128>}, {pipeline_mode = #tpu.pipeline_mode<synchronous>, transform_indices = @transform_3, window_bounds = array<i64: 1, 128>}, {pipeline_mode = #tpu.pipeline_mode<synchronous>, transform_indices = @transform_4, window_bounds = array<i64: 128, 128>}, {pipeline_mode = #tpu.pipeline_mode<synchronous>, transform_indices = @transform_5, window_bounds = array<i64: 1, 128>}, {pipeline_mode = #tpu.pipeline_mode<synchronous>, transform_indices = @transform_6, window_bounds = array<i64: 128, 128>}, {pipeline_mode = #tpu.pipeline_mode<synchronous>, transform_indices = @transform_7, window_bounds = array<i64: 1, 128>}, {pipeline_mode = #tpu.pipeline_mode<synchronous>, transform_indices = @transform_8, window_bounds = array<i64: 128, 128>}, {pipeline_mode = #tpu.pipeline_mode<synchronous>, transform_indices = @transform_9, window_bounds = array<i64: 1, 128>}, {pipeline_mode = #tpu.pipeline_mode<synchronous>, transform_indices = @transform_10, window_bounds = array<i64: 1, 128>}, {pipeline_mode = #tpu.pipeline_mode<synchronous>, transform_indices = @transform_11, window_bounds = array<i64: 1, 128>}, {pipeline_mode = #tpu.pipeline_mode<synchronous>, transform_indices = @transform_12, window_bounds = array<i64: 1, 128>}, {pipeline_mode = #tpu.pipeline_mode<synchronous>, transform_indices = @transform_13, window_bounds = array<i64: 1, 128>}, {transform_indices = @transform_14, window_bounds = array<i64: 8, 128>}, {transform_indices = @transform_15, window_bounds = array<i64: 8, 128>}]} {
    %c0 = arith.constant 0 : index
    %c0_0 = arith.constant 0 : index
    %0 = vector.load %arg1[%c0, %c0_0] : memref<8x128xf32, #tpu.memory_space<vmem>>, vector<8x128xf32>
    %c0_1 = arith.constant 0 : index
    %c0_2 = arith.constant 0 : index
    %1 = vector.load %arg2[%c0_1, %c0_2] : memref<8x128xf32, #tpu.memory_space<vmem>>, vector<8x128xf32>
    %2 = arith.truncf %0 : vector<8x128xf32> to vector<8x128xbf16>
    %c0_3 = arith.constant 0 : index
    %c0_4 = arith.constant 0 : index
    %3 = vector.load %arg3[%c0_3, %c0_4] : memref<128x128xbf16, #tpu.memory_space<vmem>>, vector<128x128xbf16>
    %cst = arith.constant dense<0.000000e+00> : vector<8x128xf32>
    %4 = tpu.matmul %2, %3, %cst {dimension_numbers = #tpu.dot_dimension_numbers<[1], [0], [0], [1], [0, 0, 1, 1], [], []>} : vector<8x128xbf16>, vector<128x128xbf16>, vector<8x128xf32> -> vector<8x128xf32>
    %c0_5 = arith.constant 0 : index
    %c0_6 = arith.constant 0 : index
    %5 = vector.load %arg4[%c0_5, %c0_6] : memref<1x128xf32, #tpu.memory_space<vmem>>, vector<1x128xf32>
    %6 = vector.broadcast %5 : vector<1x128xf32> to vector<8x128xf32>
    %7 = arith.addf %4, %6 : vector<8x128xf32>
    %cst_7 = arith.constant 0.000000e+00 : f32
    %8 = vector.broadcast %cst_7 : f32 to vector<8x128xf32>
    %9 = arith.maximumf %7, %8 : vector<8x128xf32>
    %10 = arith.truncf %9 : vector<8x128xf32> to vector<8x128xbf16>
    %c0_8 = arith.constant 0 : index
    %c0_9 = arith.constant 0 : index
    %11 = vector.load %arg5[%c0_8, %c0_9] : memref<128x128xbf16, #tpu.memory_space<vmem>>, vector<128x128xbf16>
    %cst_10 = arith.constant dense<0.000000e+00> : vector<8x128xf32>
    %12 = tpu.matmul %10, %11, %cst_10 {dimension_numbers = #tpu.dot_dimension_numbers<[1], [0], [0], [1], [0, 0, 1, 1], [], []>} : vector<8x128xbf16>, vector<128x128xbf16>, vector<8x128xf32> -> vector<8x128xf32>
    %c0_11 = arith.constant 0 : index
    %c0_12 = arith.constant 0 : index
    %13 = vector.load %arg6[%c0_11, %c0_12] : memref<1x128xf32, #tpu.memory_space<vmem>>, vector<1x128xf32>
    %14 = vector.broadcast %13 : vector<1x128xf32> to vector<8x128xf32>
    %15 = arith.addf %12, %14 : vector<8x128xf32>
    %16 = arith.addf %15, %0 : vector<8x128xf32>
    %17 = arith.truncf %1 : vector<8x128xf32> to vector<8x128xbf16>
    %c0_13 = arith.constant 0 : index
    %c0_14 = arith.constant 0 : index
    %18 = vector.load %arg7[%c0_13, %c0_14] : memref<128x128xbf16, #tpu.memory_space<vmem>>, vector<128x128xbf16>
    %cst_15 = arith.constant dense<0.000000e+00> : vector<8x128xf32>
    %19 = tpu.matmul %17, %18, %cst_15 {dimension_numbers = #tpu.dot_dimension_numbers<[1], [0], [0], [1], [0, 0, 1, 1], [], []>} : vector<8x128xbf16>, vector<128x128xbf16>, vector<8x128xf32> -> vector<8x128xf32>
    %c0_16 = arith.constant 0 : index
    %c0_17 = arith.constant 0 : index
    %20 = vector.load %arg8[%c0_16, %c0_17] : memref<1x128xf32, #tpu.memory_space<vmem>>, vector<1x128xf32>
    %21 = vector.broadcast %20 : vector<1x128xf32> to vector<8x128xf32>
    %22 = arith.addf %19, %21 : vector<8x128xf32>
    %cst_18 = arith.constant 0.000000e+00 : f32
    %23 = vector.broadcast %cst_18 : f32 to vector<8x128xf32>
    %24 = arith.maximumf %22, %23 : vector<8x128xf32>
    %25 = arith.truncf %24 : vector<8x128xf32> to vector<8x128xbf16>
    %c0_19 = arith.constant 0 : index
    %c0_20 = arith.constant 0 : index
    %26 = vector.load %arg9[%c0_19, %c0_20] : memref<128x128xbf16, #tpu.memory_space<vmem>>, vector<128x128xbf16>
    %cst_21 = arith.constant dense<0.000000e+00> : vector<8x128xf32>
    %27 = tpu.matmul %25, %26, %cst_21 {dimension_numbers = #tpu.dot_dimension_numbers<[1], [0], [0], [1], [0, 0, 1, 1], [], []>} : vector<8x128xbf16>, vector<128x128xbf16>, vector<8x128xf32> -> vector<8x128xf32>
    %c0_22 = arith.constant 0 : index
    %c0_23 = arith.constant 0 : index
    %28 = vector.load %arg10[%c0_22, %c0_23] : memref<1x128xf32, #tpu.memory_space<vmem>>, vector<1x128xf32>
    %29 = vector.broadcast %28 : vector<1x128xf32> to vector<8x128xf32>
    %30 = arith.addf %27, %29 : vector<8x128xf32>
    %31 = arith.addf %30, %1 : vector<8x128xf32>
    %cst_24 = arith.constant dense<0.000000e+00> : vector<8xf32>
    %32 = vector.multi_reduction <add>, %16, %cst_24 [1] : vector<8x128xf32> to vector<8xf32>
    %33 = vector.shape_cast %32 : vector<8xf32> to vector<8x1xf32>
    %cst_25 = arith.constant dense<0.000000e+00> : vector<8xf32>
    %34 = vector.multi_reduction <add>, %31, %cst_25 [1] : vector<8x128xf32> to vector<8xf32>
    %35 = vector.shape_cast %34 : vector<8xf32> to vector<8x1xf32>
    %36 = arith.addf %33, %35 : vector<8x1xf32>
    %cst_26 = arith.constant 3.125000e-02 : f32
    %37 = vector.broadcast %cst_26 : f32 to vector<8x1xf32>
    %38 = arith.mulf %36, %37 : vector<8x1xf32>
    %39 = vector.broadcast %38 : vector<8x1xf32> to vector<8x128xf32>
    %40 = arith.subf %16, %39 : vector<8x128xf32>
    %41 = vector.broadcast %38 : vector<8x1xf32> to vector<8x128xf32>
    %42 = arith.subf %31, %41 : vector<8x128xf32>
    %43 = arith.mulf %40, %40 : vector<8x128xf32>
    %cst_27 = arith.constant dense<0.000000e+00> : vector<8xf32>
    %44 = vector.multi_reduction <add>, %43, %cst_27 [1] : vector<8x128xf32> to vector<8xf32>
    %45 = vector.shape_cast %44 : vector<8xf32> to vector<8x1xf32>
    %46 = arith.mulf %42, %42 : vector<8x128xf32>
    %cst_28 = arith.constant dense<0.000000e+00> : vector<8xf32>
    %47 = vector.multi_reduction <add>, %46, %cst_28 [1] : vector<8x128xf32> to vector<8xf32>
    %48 = vector.shape_cast %47 : vector<8xf32> to vector<8x1xf32>
    %49 = arith.addf %45, %48 : vector<8x1xf32>
    %50 = arith.mulf %38, %38 : vector<8x1xf32>
    %cst_29 = arith.constant 2.240000e+02 : f32
    %51 = vector.broadcast %cst_29 : f32 to vector<8x1xf32>
    %52 = arith.mulf %51, %50 : vector<8x1xf32>
    %53 = arith.subf %49, %52 : vector<8x1xf32>
    %cst_30 = arith.constant 0.0322580636 : f32
    %54 = vector.broadcast %cst_30 : f32 to vector<8x1xf32>
    %55 = arith.mulf %53, %54 : vector<8x1xf32>
    %56 = math.sqrt %55 : vector<8x1xf32>
    %cst_31 = arith.constant 1.000000e-03 : f32
    %57 = vector.broadcast %cst_31 : f32 to vector<8x1xf32>
    %58 = arith.addf %56, %57 : vector<8x1xf32>
    %59 = tpu.reciprocal %58 {approx = true} : vector<8x1xf32> -> vector<8x1xf32>
    %60 = arith.mulf %58, %59 : vector<8x1xf32>
    %cst_32 = arith.constant 2.000000e+00 : f32
    %61 = vector.broadcast %cst_32 : f32 to vector<8x1xf32>
    %62 = arith.subf %61, %60 : vector<8x1xf32>
    %63 = arith.mulf %59, %62 : vector<8x1xf32>
    %64 = vector.broadcast %63 : vector<8x1xf32> to vector<8x128xf32>
    %65 = arith.mulf %40, %64 : vector<8x128xf32>
    %c0_33 = arith.constant 0 : index
    %c0_34 = arith.constant 0 : index
    %66 = vector.load %arg11[%c0_33, %c0_34] : memref<1x128xf32, #tpu.memory_space<vmem>>, vector<1x128xf32>
    %67 = vector.broadcast %66 : vector<1x128xf32> to vector<8x128xf32>
    %68 = arith.mulf %65, %67 : vector<8x128xf32>
    %c0_35 = arith.constant 0 : index
    %c0_36 = arith.constant 0 : index
    %69 = vector.load %arg12[%c0_35, %c0_36] : memref<1x128xf32, #tpu.memory_space<vmem>>, vector<1x128xf32>
    %70 = vector.broadcast %69 : vector<1x128xf32> to vector<8x128xf32>
    %71 = arith.addf %68, %70 : vector<8x128xf32>
    %c0_37 = arith.constant 0 : index
    %c0_38 = arith.constant 0 : index
    %72 = vector.load %arg15[%c0_37, %c0_38] : memref<8x128xf32, #tpu.memory_space<vmem>>, vector<8x128xf32>
    tpu.vector_store %arg15[%c0_37, %c0_38], %71 {strides = array<i32>} : memref<8x128xf32, #tpu.memory_space<vmem>>, vector<8x128xf32>,
    %73 = vector.broadcast %63 : vector<8x1xf32> to vector<8x128xf32>
    %74 = arith.mulf %42, %73 : vector<8x128xf32>
    %c0_39 = arith.constant 0 : index
    %c0_40 = arith.constant 0 : index
    %75 = vector.load %arg13[%c0_39, %c0_40] : memref<1x128xf32, #tpu.memory_space<vmem>>, vector<1x128xf32>
    %76 = vector.broadcast %75 : vector<1x128xf32> to vector<8x128xf32>
    %77 = arith.mulf %74, %76 : vector<8x128xf32>
    %c0_41 = arith.constant 0 : index
    %c0_42 = arith.constant 0 : index
    %78 = vector.load %arg14[%c0_41, %c0_42] : memref<1x128xf32, #tpu.memory_space<vmem>>, vector<1x128xf32>
    %79 = vector.broadcast %78 : vector<1x128xf32> to vector<8x128xf32>
    %80 = arith.addf %77, %79 : vector<8x128xf32>
    %c0_43 = arith.constant 0 : index
    %c0_44 = arith.constant 0 : index
    %81 = vector.load %arg16[%c0_43, %c0_44] : memref<8x128xf32, #tpu.memory_space<vmem>>, vector<8x128xf32>
    tpu.vector_store %arg16[%c0_43, %c0_44], %80 {strides = array<i32>} : memref<8x128xf32, #tpu.memory_space<vmem>>, vector<8x128xf32>,
    return
  }
  func.func @transform_0(%arg0: i32) -> (i32, i32) {
    %c0_i32 = arith.constant 0 : i32
    %c0_i32_0 = arith.constant 0 : i32
    return %arg0, %c0_i32 : i32, i32
  }
  func.func @transform_1(%arg0: i32) -> (i32, i32) {
    %c0_i32 = arith.constant 0 : i32
    %c0_i32_0 = arith.constant 0 : i32
    return %arg0, %c0_i32 : i32, i32
  }
  func.func @transform_2(%arg0: i32) -> (i32, i32) {
    %c0_i32 = arith.constant 0 : i32
    %c0_i32_0 = arith.constant 0 : i32
    %c0_i32_1 = arith.constant 0 : i32
    return %c0_i32, %c0_i32_0 : i32, i32
  }
  func.func @transform_3(%arg0: i32) -> (i32, i32) {
    %c0_i32 = arith.constant 0 : i32
    %c0_i32_0 = arith.constant 0 : i32
    %c0_i32_1 = arith.constant 0 : i32
    return %c0_i32, %c0_i32_0 : i32, i32
  }
  func.func @transform_4(%arg0: i32) -> (i32, i32) {
    %c0_i32 = arith.constant 0 : i32
    %c0_i32_0 = arith.constant 0 : i32
    %c0_i32_1 = arith.constant 0 : i32
    return %c0_i32, %c0_i32_0 : i32, i32
  }
  func.func @transform_5(%arg0: i32) -> (i32, i32) {
    %c0_i32 = arith.constant 0 : i32
    %c0_i32_0 = arith.constant 0 : i32
    %c0_i32_1 = arith.constant 0 : i32
    return %c0_i32, %c0_i32_0 : i32, i32
  }
  func.func @transform_6(%arg0: i32) -> (i32, i32) {
    %c0_i32 = arith.constant 0 : i32
    %c0_i32_0 = arith.constant 0 : i32
    %c0_i32_1 = arith.constant 0 : i32
    return %c0_i32, %c0_i32_0 : i32, i32
  }
  func.func @transform_7(%arg0: i32) -> (i32, i32) {
    %c0_i32 = arith.constant 0 : i32
    %c0_i32_0 = arith.constant 0 : i32
    %c0_i32_1 = arith.constant 0 : i32
    return %c0_i32, %c0_i32_0 : i32, i32
  }
  func.func @transform_8(%arg0: i32) -> (i32, i32) {
    %c0_i32 = arith.constant 0 : i32
    %c0_i32_0 = arith.constant 0 : i32
    %c0_i32_1 = arith.constant 0 : i32
    return %c0_i32, %c0_i32_0 : i32, i32
  }
  func.func @transform_9(%arg0: i32) -> (i32, i32) {
    %c0_i32 = arith.constant 0 : i32
    %c0_i32_0 = arith.constant 0 : i32
    %c0_i32_1 = arith.constant 0 : i32
    return %c0_i32, %c0_i32_0 : i32, i32
  }
  func.func @transform_10(%arg0: i32) -> (i32, i32) {
    %c0_i32 = arith.constant 0 : i32
    %c0_i32_0 = arith.constant 0 : i32
    %c0_i32_1 = arith.constant 0 : i32
    return %c0_i32, %c0_i32_0 : i32, i32
  }
  func.func @transform_11(%arg0: i32) -> (i32, i32) {
    %c0_i32 = arith.constant 0 : i32
    %c0_i32_0 = arith.constant 0 : i32
    %c0_i32_1 = arith.constant 0 : i32
    return %c0_i32, %c0_i32_0 : i32, i32
  }
  func.func @transform_12(%arg0: i32) -> (i32, i32) {
    %c0_i32 = arith.constant 0 : i32
    %c0_i32_0 = arith.constant 0 : i32
    %c0_i32_1 = arith.constant 0 : i32
    return %c0_i32, %c0_i32_0 : i32, i32
  }
  func.func @transform_13(%arg0: i32) -> (i32, i32) {
    %c0_i32 = arith.constant 0 : i32
    %c0_i32_0 = arith.constant 0 : i32
    %c0_i32_1 = arith.constant 0 : i32
    return %c0_i32, %c0_i32_0 : i32, i32
  }
  func.func @transform_14(%arg0: i32) -> (i32, i32) {
    %c0_i32 = arith.constant 0 : i32
    %c0_i32_0 = arith.constant 0 : i32
    return %arg0, %c0_i32 : i32, i32
  }
  func.func @transform_15(%arg0: i32) -> (i32, i32) {
    %c0_i32 = arith.constant 0 : i32
    %c0_i32_0 = arith.constant 0 : i32
    return %arg0, %c0_i32 : i32, i32
  }
}

module attributes {stable_mosaic.version = 11 : i64} {
  func.func @_ffn_kernel_split(%arg0: i32, %arg1: memref<8x128xf32, #tpu.memory_space<vmem>>, %arg2: memref<8x128xf32, #tpu.memory_space<vmem>>, %arg3: memref<128x128xbf16, #tpu.memory_space<vmem>>, %arg4: memref<1x128xf32, #tpu.memory_space<vmem>>, %arg5: memref<128x128xbf16, #tpu.memory_space<vmem>>, %arg6: memref<1x128xf32, #tpu.memory_space<vmem>>, %arg7: memref<128x128xbf16, #tpu.memory_space<vmem>>, %arg8: memref<1x128xf32, #tpu.memory_space<vmem>>, %arg9: memref<128x128xbf16, #tpu.memory_space<vmem>>, %arg10: memref<1x128xf32, #tpu.memory_space<vmem>>, %arg11: memref<1x128xf32, #tpu.memory_space<vmem>>, %arg12: memref<1x128xf32, #tpu.memory_space<vmem>>, %arg13: memref<1x128xf32, #tpu.memory_space<vmem>>, %arg14: memref<1x128xf32, #tpu.memory_space<vmem>>, %arg15: memref<8x128xf32, #tpu.memory_space<vmem>>, %arg16: memref<8x128xf32, #tpu.memory_space<vmem>>) attributes {dimension_semantics = [#tpu.dimension_semantics<parallel>], iteration_bounds = array<i64: 1>, scalar_prefetch = 0 : i64, scratch_operands = 0 : i64, tpu.core_type = #tpu.core_type<tc>, window_params = [{transform_indices = @transform_0, window_bounds = array<i64: 8, 128>}, {transform_indices = @transform_1, window_bounds = array<i64: 8, 128>}, {pipeline_mode = #tpu.pipeline_mode<synchronous>, transform_indices = @transform_2, window_bounds = array<i64: 128, 128>}, {pipeline_mode = #tpu.pipeline_mode<synchronous>, transform_indices = @transform_3, window_bounds = array<i64: 1, 128>}, {pipeline_mode = #tpu.pipeline_mode<synchronous>, transform_indices = @transform_4, window_bounds = array<i64: 128, 128>}, {pipeline_mode = #tpu.pipeline_mode<synchronous>, transform_indices = @transform_5, window_bounds = array<i64: 1, 128>}, {pipeline_mode = #tpu.pipeline_mode<synchronous>, transform_indices = @transform_6, window_bounds = array<i64: 128, 128>}, {pipeline_mode = #tpu.pipeline_mode<synchronous>, transform_indices = @transform_7, window_bounds = array<i64: 1, 128>}, {pipeline_mode = #tpu.pipeline_mode<synchronous>, transform_indices = @transform_8, window_bounds = array<i64: 128, 128>}, {pipeline_mode = #tpu.pipeline_mode<synchronous>, transform_indices = @transform_9, window_bounds = array<i64: 1, 128>}, {pipeline_mode = #tpu.pipeline_mode<synchronous>, transform_indices = @transform_10, window_bounds = array<i64: 1, 128>}, {pipeline_mode = #tpu.pipeline_mode<synchronous>, transform_indices = @transform_11, window_bounds = array<i64: 1, 128>}, {pipeline_mode = #tpu.pipeline_mode<synchronous>, transform_indices = @transform_12, window_bounds = array<i64: 1, 128>}, {pipeline_mode = #tpu.pipeline_mode<synchronous>, transform_indices = @transform_13, window_bounds = array<i64: 1, 128>}, {transform_indices = @transform_14, window_bounds = array<i64: 8, 128>}, {transform_indices = @transform_15, window_bounds = array<i64: 8, 128>}]} {
    %c0 = arith.constant 0 : index
    %c0_0 = arith.constant 0 : index
    %0 = vector.load %arg1[%c0, %c0_0] : memref<8x128xf32, #tpu.memory_space<vmem>>, vector<8x128xf32>
    %c0_1 = arith.constant 0 : index
    %c0_2 = arith.constant 0 : index
    %1 = vector.load %arg2[%c0_1, %c0_2] : memref<8x128xf32, #tpu.memory_space<vmem>>, vector<8x128xf32>
    %2 = arith.truncf %0 : vector<8x128xf32> to vector<8x128xbf16>
    %c0_3 = arith.constant 0 : index
    %c0_4 = arith.constant 0 : index
    %3 = vector.load %arg3[%c0_3, %c0_4] : memref<128x128xbf16, #tpu.memory_space<vmem>>, vector<128x128xbf16>
    %cst = arith.constant dense<0.000000e+00> : vector<8x128xf32>
    %4 = tpu.matmul %2, %3, %cst {dimension_numbers = #tpu.dot_dimension_numbers<[1], [0], [0], [1], [0, 0, 1, 1], [], []>} : vector<8x128xbf16>, vector<128x128xbf16>, vector<8x128xf32> -> vector<8x128xf32>
    %c0_5 = arith.constant 0 : index
    %c0_6 = arith.constant 0 : index
    %5 = vector.load %arg4[%c0_5, %c0_6] : memref<1x128xf32, #tpu.memory_space<vmem>>, vector<1x128xf32>
    %6 = vector.broadcast %5 : vector<1x128xf32> to vector<8x128xf32>
    %7 = arith.addf %4, %6 : vector<8x128xf32>
    %cst_7 = arith.constant 0.000000e+00 : f32
    %8 = vector.broadcast %cst_7 : f32 to vector<8x128xf32>
    %9 = arith.maximumf %7, %8 : vector<8x128xf32>
    %10 = arith.truncf %9 : vector<8x128xf32> to vector<8x128xbf16>
    %c0_8 = arith.constant 0 : index
    %c0_9 = arith.constant 0 : index
    %11 = vector.load %arg5[%c0_8, %c0_9] : memref<128x128xbf16, #tpu.memory_space<vmem>>, vector<128x128xbf16>
    %cst_10 = arith.constant dense<0.000000e+00> : vector<8x128xf32>
    %12 = tpu.matmul %10, %11, %cst_10 {dimension_numbers = #tpu.dot_dimension_numbers<[1], [0], [0], [1], [0, 0, 1, 1], [], []>} : vector<8x128xbf16>, vector<128x128xbf16>, vector<8x128xf32> -> vector<8x128xf32>
    %c0_11 = arith.constant 0 : index
    %c0_12 = arith.constant 0 : index
    %13 = vector.load %arg6[%c0_11, %c0_12] : memref<1x128xf32, #tpu.memory_space<vmem>>, vector<1x128xf32>
    %14 = vector.broadcast %13 : vector<1x128xf32> to vector<8x128xf32>
    %15 = arith.addf %12, %14 : vector<8x128xf32>
    %16 = arith.addf %15, %0 : vector<8x128xf32>
    %17 = arith.truncf %1 : vector<8x128xf32> to vector<8x128xbf16>
    %c0_13 = arith.constant 0 : index
    %c0_14 = arith.constant 0 : index
    %18 = vector.load %arg7[%c0_13, %c0_14] : memref<128x128xbf16, #tpu.memory_space<vmem>>, vector<128x128xbf16>
    %cst_15 = arith.constant dense<0.000000e+00> : vector<8x128xf32>
    %19 = tpu.matmul %17, %18, %cst_15 {dimension_numbers = #tpu.dot_dimension_numbers<[1], [0], [0], [1], [0, 0, 1, 1], [], []>} : vector<8x128xbf16>, vector<128x128xbf16>, vector<8x128xf32> -> vector<8x128xf32>
    %c0_16 = arith.constant 0 : index
    %c0_17 = arith.constant 0 : index
    %20 = vector.load %arg8[%c0_16, %c0_17] : memref<1x128xf32, #tpu.memory_space<vmem>>, vector<1x128xf32>
    %21 = vector.broadcast %20 : vector<1x128xf32> to vector<8x128xf32>
    %22 = arith.addf %19, %21 : vector<8x128xf32>
    %cst_18 = arith.constant 0.000000e+00 : f32
    %23 = vector.broadcast %cst_18 : f32 to vector<8x128xf32>
    %24 = arith.maximumf %22, %23 : vector<8x128xf32>
    %25 = arith.truncf %24 : vector<8x128xf32> to vector<8x128xbf16>
    %c0_19 = arith.constant 0 : index
    %c0_20 = arith.constant 0 : index
    %26 = vector.load %arg9[%c0_19, %c0_20] : memref<128x128xbf16, #tpu.memory_space<vmem>>, vector<128x128xbf16>
    %cst_21 = arith.constant dense<0.000000e+00> : vector<8x128xf32>
    %27 = tpu.matmul %25, %26, %cst_21 {dimension_numbers = #tpu.dot_dimension_numbers<[1], [0], [0], [1], [0, 0, 1, 1], [], []>} : vector<8x128xbf16>, vector<128x128xbf16>, vector<8x128xf32> -> vector<8x128xf32>
    %c0_22 = arith.constant 0 : index
    %c0_23 = arith.constant 0 : index
    %28 = vector.load %arg10[%c0_22, %c0_23] : memref<1x128xf32, #tpu.memory_space<vmem>>, vector<1x128xf32>
    %29 = vector.broadcast %28 : vector<1x128xf32> to vector<8x128xf32>
    %30 = arith.addf %27, %29 : vector<8x128xf32>
    %31 = arith.addf %30, %1 : vector<8x128xf32>
    %cst_24 = arith.constant dense<0.000000e+00> : vector<8xf32>
    %32 = vector.multi_reduction <add>, %16, %cst_24 [1] : vector<8x128xf32> to vector<8xf32>
    %33 = vector.shape_cast %32 : vector<8xf32> to vector<8x1xf32>
    %cst_25 = arith.constant dense<0.000000e+00> : vector<8xf32>
    %34 = vector.multi_reduction <add>, %31, %cst_25 [1] : vector<8x128xf32> to vector<8xf32>
    %35 = vector.shape_cast %34 : vector<8xf32> to vector<8x1xf32>
    %36 = arith.addf %33, %35 : vector<8x1xf32>
    %cst_26 = arith.constant 3.125000e-02 : f32
    %37 = vector.broadcast %cst_26 : f32 to vector<8x1xf32>
    %38 = arith.mulf %36, %37 : vector<8x1xf32>
    %39 = vector.broadcast %38 : vector<8x1xf32> to vector<8x128xf32>
    %40 = arith.subf %16, %39 : vector<8x128xf32>
    %41 = vector.broadcast %38 : vector<8x1xf32> to vector<8x128xf32>
    %42 = arith.subf %31, %41 : vector<8x128xf32>
    %43 = arith.mulf %40, %40 : vector<8x128xf32>
    %cst_27 = arith.constant dense<0.000000e+00> : vector<8xf32>
    %44 = vector.multi_reduction <add>, %43, %cst_27 [1] : vector<8x128xf32> to vector<8xf32>
    %45 = vector.shape_cast %44 : vector<8xf32> to vector<8x1xf32>
    %46 = arith.mulf %42, %42 : vector<8x128xf32>
    %cst_28 = arith.constant dense<0.000000e+00> : vector<8xf32>
    %47 = vector.multi_reduction <add>, %46, %cst_28 [1] : vector<8x128xf32> to vector<8xf32>
    %48 = vector.shape_cast %47 : vector<8xf32> to vector<8x1xf32>
    %49 = arith.addf %45, %48 : vector<8x1xf32>
    %50 = arith.mulf %38, %38 : vector<8x1xf32>
    %cst_29 = arith.constant 2.240000e+02 : f32
    %51 = vector.broadcast %cst_29 : f32 to vector<8x1xf32>
    %52 = arith.mulf %51, %50 : vector<8x1xf32>
    %53 = arith.subf %49, %52 : vector<8x1xf32>
    %cst_30 = arith.constant 0.0322580636 : f32
    %54 = vector.broadcast %cst_30 : f32 to vector<8x1xf32>
    %55 = arith.mulf %53, %54 : vector<8x1xf32>
    %56 = math.sqrt %55 : vector<8x1xf32>
    %cst_31 = arith.constant 1.000000e-03 : f32
    %57 = vector.broadcast %cst_31 : f32 to vector<8x1xf32>
    %58 = arith.addf %56, %57 : vector<8x1xf32>
    %59 = tpu.reciprocal %58 {approx = true} : vector<8x1xf32> -> vector<8x1xf32>
    %60 = arith.mulf %58, %59 : vector<8x1xf32>
    %cst_32 = arith.constant 2.000000e+00 : f32
    %61 = vector.broadcast %cst_32 : f32 to vector<8x1xf32>
    %62 = arith.subf %61, %60 : vector<8x1xf32>
    %63 = arith.mulf %59, %62 : vector<8x1xf32>
    %64 = vector.broadcast %63 : vector<8x1xf32> to vector<8x128xf32>
    %65 = arith.mulf %40, %64 : vector<8x128xf32>
    %c0_33 = arith.constant 0 : index
    %c0_34 = arith.constant 0 : index
    %66 = vector.load %arg11[%c0_33, %c0_34] : memref<1x128xf32, #tpu.memory_space<vmem>>, vector<1x128xf32>
    %67 = vector.broadcast %66 : vector<1x128xf32> to vector<8x128xf32>
    %68 = arith.mulf %65, %67 : vector<8x128xf32>
    %c0_35 = arith.constant 0 : index
    %c0_36 = arith.constant 0 : index
    %69 = vector.load %arg12[%c0_35, %c0_36] : memref<1x128xf32, #tpu.memory_space<vmem>>, vector<1x128xf32>
    %70 = vector.broadcast %69 : vector<1x128xf32> to vector<8x128xf32>
    %71 = arith.addf %68, %70 : vector<8x128xf32>
    %c0_37 = arith.constant 0 : index
    %c0_38 = arith.constant 0 : index
    %72 = vector.load %arg15[%c0_37, %c0_38] : memref<8x128xf32, #tpu.memory_space<vmem>>, vector<8x128xf32>
    tpu.vector_store %arg15[%c0_37, %c0_38], %71 {strides = array<i32>} : memref<8x128xf32, #tpu.memory_space<vmem>>, vector<8x128xf32>,
    %73 = vector.broadcast %63 : vector<8x1xf32> to vector<8x128xf32>
    %74 = arith.mulf %42, %73 : vector<8x128xf32>
    %c0_39 = arith.constant 0 : index
    %c0_40 = arith.constant 0 : index
    %75 = vector.load %arg13[%c0_39, %c0_40] : memref<1x128xf32, #tpu.memory_space<vmem>>, vector<1x128xf32>
    %76 = vector.broadcast %75 : vector<1x128xf32> to vector<8x128xf32>
    %77 = arith.mulf %74, %76 : vector<8x128xf32>
    %c0_41 = arith.constant 0 : index
    %c0_42 = arith.constant 0 : index
    %78 = vector.load %arg14[%c0_41, %c0_42] : memref<1x128xf32, #tpu.memory_space<vmem>>, vector<1x128xf32>
    %79 = vector.broadcast %78 : vector<1x128xf32> to vector<8x128xf32>
    %80 = arith.addf %77, %79 : vector<8x128xf32>
    %c0_43 = arith.constant 0 : index
    %c0_44 = arith.constant 0 : index
    %81 = vector.load %arg16[%c0_43, %c0_44] : memref<8x128xf32, #tpu.memory_space<vmem>>, vector<8x128xf32>
    tpu.vector_store %arg16[%c0_43, %c0_44], %80 {strides = array<i32>} : memref<8x128xf32, #tpu.memory_space<vmem>>, vector<8x128xf32>,
    return
  }
  func.func @transform_0(%arg0: i32) -> (i32, i32) {
    %c0_i32 = arith.constant 0 : i32
    %c0_i32_0 = arith.constant 0 : i32
    return %arg0, %c0_i32 : i32, i32
  }
  func.func @transform_1(%arg0: i32) -> (i32, i32) {
    %c0_i32 = arith.constant 0 : i32
    %c0_i32_0 = arith.constant 0 : i32
    return %arg0, %c0_i32 : i32, i32
  }
  func.func @transform_2(%arg0: i32) -> (i32, i32) {
    %c0_i32 = arith.constant 0 : i32
    %c0_i32_0 = arith.constant 0 : i32
    %c0_i32_1 = arith.constant 0 : i32
    return %c0_i32, %c0_i32_0 : i32, i32
  }
  func.func @transform_3(%arg0: i32) -> (i32, i32) {
    %c0_i32 = arith.constant 0 : i32
    %c0_i32_0 = arith.constant 0 : i32
    %c0_i32_1 = arith.constant 0 : i32
    return %c0_i32, %c0_i32_0 : i32, i32
  }
  func.func @transform_4(%arg0: i32) -> (i32, i32) {
    %c0_i32 = arith.constant 0 : i32
    %c0_i32_0 = arith.constant 0 : i32
    %c0_i32_1 = arith.constant 0 : i32
    return %c0_i32, %c0_i32_0 : i32, i32
  }
  func.func @transform_5(%arg0: i32) -> (i32, i32) {
    %c0_i32 = arith.constant 0 : i32
    %c0_i32_0 = arith.constant 0 : i32
    %c0_i32_1 = arith.constant 0 : i32
    return %c0_i32, %c0_i32_0 : i32, i32
  }
  func.func @transform_6(%arg0: i32) -> (i32, i32) {
    %c0_i32 = arith.constant 0 : i32
    %c0_i32_0 = arith.constant 0 : i32
    %c0_i32_1 = arith.constant 0 : i32
    return %c0_i32, %c0_i32_0 : i32, i32
  }
  func.func @transform_7(%arg0: i32) -> (i32, i32) {
    %c0_i32 = arith.constant 0 : i32
    %c0_i32_0 = arith.constant 0 : i32
    %c0_i32_1 = arith.constant 0 : i32
    return %c0_i32, %c0_i32_0 : i32, i32
  }
  func.func @transform_8(%arg0: i32) -> (i32, i32) {
    %c0_i32 = arith.constant 0 : i32
    %c0_i32_0 = arith.constant 0 : i32
    %c0_i32_1 = arith.constant 0 : i32
    return %c0_i32, %c0_i32_0 : i32, i32
  }
  func.func @transform_9(%arg0: i32) -> (i32, i32) {
    %c0_i32 = arith.constant 0 : i32
    %c0_i32_0 = arith.constant 0 : i32
    %c0_i32_1 = arith.constant 0 : i32
    return %c0_i32, %c0_i32_0 : i32, i32
  }
  func.func @transform_10(%arg0: i32) -> (i32, i32) {
    %c0_i32 = arith.constant 0 : i32
    %c0_i32_0 = arith.constant 0 : i32
    %c0_i32_1 = arith.constant 0 : i32
    return %c0_i32, %c0_i32_0 : i32, i32
  }
  func.func @transform_11(%arg0: i32) -> (i32, i32) {
    %c0_i32 = arith.constant 0 : i32
    %c0_i32_0 = arith.constant 0 : i32
    %c0_i32_1 = arith.constant 0 : i32
    return %c0_i32, %c0_i32_0 : i32, i32
  }
  func.func @transform_12(%arg0: i32) -> (i32, i32) {
    %c0_i32 = arith.constant 0 : i32
    %c0_i32_0 = arith.constant 0 : i32
    %c0_i32_1 = arith.constant 0 : i32
    return %c0_i32, %c0_i32_0 : i32, i32
  }
  func.func @transform_13(%arg0: i32) -> (i32, i32) {
    %c0_i32 = arith.constant 0 : i32
    %c0_i32_0 = arith.constant 0 : i32
    %c0_i32_1 = arith.constant 0 : i32
    return %c0_i32, %c0_i32_0 : i32, i32
  }
  func.func @transform_14(%arg0: i32) -> (i32, i32) {
    %c0_i32 = arith.constant 0 : i32
    %c0_i32_0 = arith.constant 0 : i32
    return %arg0, %c0_i32 : i32, i32
  }
  func.func @transform_15(%arg0: i32) -> (i32, i32) {
    %c0_i32 = arith.constant 0 : i32
    %c0_i32_0 = arith.constant 0 : i32
    return %arg0, %c0_i32 : i32, i32
  }
}

</mosaic_0001>

<llo_original>
// kernel: tpu_custom_call.1
$region0: #{tpu_custom_call.1}
  #allocation0 [shape = 'u32[]', space=smem, size = 0x4, offset = 0x4, fixed_abs, tag = 'smem constant byte address 0x4 - core index']
  #allocation1 [shape = 'u32[72,128]{1,0:T(1,128)}', space=vmem, size = 0x9000, scoped, tag = 'internal scratch']
  %s0 = inlined_call_operand.hbm [shape: f32[8,128], index: 0, kind: input, shape index: {}]
  %s1 = inlined_call_operand.hbm [shape: f32[8,128], index: 1, kind: input, shape index: {}]
  %s2 = inlined_call_operand.hbm [shape: bf16[128,128], index: 2, kind: input, shape index: {}]
  %s3 = inlined_call_operand.vmem [shape: f32[1,128], index: 3, kind: input, shape index: {}]
  %s4 = inlined_call_operand.hbm [shape: bf16[128,128], index: 4, kind: input, shape index: {}]
  %s5 = inlined_call_operand.vmem [shape: f32[1,128], index: 5, kind: input, shape index: {}]
  %s6 = inlined_call_operand.hbm [shape: bf16[128,128], index: 6, kind: input, shape index: {}]
  %s7 = inlined_call_operand.vmem [shape: f32[1,128], index: 7, kind: input, shape index: {}]
  %s8 = inlined_call_operand.hbm [shape: bf16[128,128], index: 8, kind: input, shape index: {}]
  %s9 = inlined_call_operand.vmem [shape: f32[1,128], index: 9, kind: input, shape index: {}]
  %s10 = inlined_call_operand.vmem [shape: f32[1,128], index: 10, kind: input, shape index: {}]
  %s11 = inlined_call_operand.vmem [shape: f32[1,128], index: 11, kind: input, shape index: {}]
  %s12 = inlined_call_operand.vmem [shape: f32[1,128], index: 12, kind: input, shape index: {}]
  %s13 = inlined_call_operand.vmem [shape: f32[1,128], index: 13, kind: input, shape index: {}]
  %s14 = inlined_call_operand.hbm [shape: f32[8,128], index: 14, kind: output, shape index: {0}]
  %s15 = inlined_call_operand.hbm [shape: f32[8,128], index: 15, kind: output, shape index: {1}]
  %16 = xla_tuple %s14, %s15
  %s17 = sld [smem:[#allocation0]]
  $region98: #{tpu_custom_call.1} parent=0
    _
  %s19 = ssub.s32 1, %s17
  %s20 = scalar_select 0, %s19, %s17
  $region1: #{tpu_custom_call.1} parent=0
    #allocation2 [shape = 'u8[4096]{0}', space=vmem, size = 0x1000, scoped, tag = 'input window, operand 0, single buffered']
    #allocation3 [shape = 's32[1]{0}', space=sflag, size = 0x4, scoped, tag = 'scoped memory for tpu_custom_call.1']
    #allocation4 [shape = 's32[1]{0}', space=sflag, size = 0x4, scoped, tag = 'scoped memory for tpu_custom_call.1']
    #allocation5 [shape = 'u8[4096]{0}', space=vmem, size = 0x1000, scoped, tag = 'input window, operand 1, single buffered']
    #allocation6 [shape = 's32[1]{0}', space=sflag, size = 0x4, scoped, tag = 'scoped memory for tpu_custom_call.1']
    #allocation7 [shape = 'u8[32768]{0}', space=vmem, size = 0x8000, scoped, tag = 'input window, operand 2, single buffered']
    #allocation8 [shape = 'u8[32768]{0}', space=vmem, size = 0x8000, scoped, tag = 'input window, operand 4, single buffered']
    #allocation9 [shape = 's32[1]{0}', space=sflag, size = 0x4, scoped, tag = 'scoped memory for tpu_custom_call.1']
    #allocation10 [shape = 'u8[32768]{0}', space=vmem, size = 0x8000, scoped, tag = 'input window, operand 6, single buffered']
    #allocation11 [shape = 'u8[32768]{0}', space=vmem, size = 0x8000, scoped, tag = 'input window, operand 8, single buffered']
    #allocation12 [shape = 's32[1]{0}', space=sflag, size = 0x4, scoped, tag = 'scoped memory for tpu_custom_call.1']
    #allocation13 [shape = 'u8[4096]{0}', space=vmem, size = 0x1000, scoped, tag = 'output window, operand 0, single buffered']
    #allocation14 [shape = 'u8[4096]{0}', space=vmem, size = 0x1000, scoped, tag = 'output window, operand 1, single buffered']
    #allocation15 [shape = 's32[1]{0}', space=sflag, size = 0x4, scoped, tag = 'scoped memory for tpu_custom_call.1']
    %21 = vsyncpa [#allocation3], 0
    %22 = vsyncpa [#allocation6], 0
    %23 = vsyncpa [#allocation9], 0
    %24 = vsyncpa [#allocation12], 0
    %25 = vsyncpa [#allocation4], 0
    %26 = vsyncpa [#allocation15], 0
    // Predicated region
    $region2: #{tpu_custom_call.1} parent=1 // pred_check
      _
    $region3: #{tpu_custom_call.1} parent=1 // pred_check_branch
      %28 = sbr.rel (0) target = $region5
    $region4: #{tpu_custom_call.1} parent=1 // pred_region
      %30 = vsyncadd [#allocation3], 0
      %s32 = sshll.u32 %s0, 4
      %s33 = int_to_ptr.hbm [resolvable:$true] %s32
      %s34 = sshll.u32 [#allocation2], 4
      %s35 = int_to_ptr.vmem [resolvable:$true] %s34
      %37 = dma.hbm_to_vmem [thread:$0]  %s33, 128, %s35, [#allocation3]
    $region5: #{tpu_custom_call.1} parent=1 // pred_fallthru
      _
    // Predicated region
    $region6: #{tpu_custom_call.1} parent=1 // pred_check
      _
    $region7: #{tpu_custom_call.1} parent=1 // pred_check_branch
      %39 = sbr.rel (0) target = $region9
    $region8: #{tpu_custom_call.1} parent=1 // pred_region
      %41 = vsyncadd [#allocation6], 0
      %s43 = sshll.u32 %s1, 4
      %s44 = int_to_ptr.hbm [resolvable:$true] %s43
      %s45 = sshll.u32 [#allocation5], 4
      %s46 = int_to_ptr.vmem [resolvable:$true] %s45
      %48 = dma.hbm_to_vmem [thread:$0]  %s44, 128, %s46, [#allocation6]
    $region9: #{tpu_custom_call.1} parent=1 // pred_fallthru
      _
    // Predicated region
    $region10: #{tpu_custom_call.1} parent=1 // pred_check
      _
    $region11: #{tpu_custom_call.1} parent=1 // pred_check_branch
      %50 = sbr.rel (0) target = $region13
    $region12: #{tpu_custom_call.1} parent=1 // pred_region
      %52 = vsyncadd [#allocation6], 0
      %s53 = sshll.u32 %s2, 4
      %s54 = int_to_ptr.hbm [resolvable:$true] %s53
      %s55 = sshll.u32 [#allocation7], 4
      %s56 = int_to_ptr.vmem [resolvable:$true] %s55
      %61 = dma.hbm_to_vmem [thread:$0]  %s54, 1024, %s56, [#allocation6], 64, 64, 4
    $region13: #{tpu_custom_call.1} parent=1 // pred_fallthru
      _
    // Predicated region
    $region14: #{tpu_custom_call.1} parent=1 // pred_check
      _
    $region15: #{tpu_custom_call.1} parent=1 // pred_check_branch
      %63 = sbr.rel (0) target = $region17
    $region16: #{tpu_custom_call.1} parent=1 // pred_region
      _
    $region17: #{tpu_custom_call.1} parent=1 // pred_fallthru
      _
    // Predicated region
    $region18: #{tpu_custom_call.1} parent=1 // pred_check
      _
    $region19: #{tpu_custom_call.1} parent=1 // pred_check_branch
      %65 = sbr.rel (0) target = $region21
    $region20: #{tpu_custom_call.1} parent=1 // pred_region
      %67 = vsyncadd [#allocation9], 0
      %s68 = sshll.u32 %s4, 4
      %s69 = int_to_ptr.hbm [resolvable:$true] %s68
      %s70 = sshll.u32 [#allocation8], 4
      %s71 = int_to_ptr.vmem [resolvable:$true] %s70
      %76 = dma.hbm_to_vmem [thread:$0]  %s69, 1024, %s71, [#allocation9], 64, 64, 4
    $region21: #{tpu_custom_call.1} parent=1 // pred_fallthru
      _
    // Predicated region
    $region22: #{tpu_custom_call.1} parent=1 // pred_check
      _
    $region23: #{tpu_custom_call.1} parent=1 // pred_check_branch
      %78 = sbr.rel (0) target = $region25
    $region24: #{tpu_custom_call.1} parent=1 // pred_region
      _
    $region25: #{tpu_custom_call.1} parent=1 // pred_fallthru
      _
    // Predicated region
    $region26: #{tpu_custom_call.1} parent=1 // pred_check
      _
    $region27: #{tpu_custom_call.1} parent=1 // pred_check_branch
      %80 = sbr.rel (0) target = $region29
    $region28: #{tpu_custom_call.1} parent=1 // pred_region
      %82 = vsyncadd [#allocation9], 0
      %s83 = sshll.u32 %s6, 4
      %s84 = int_to_ptr.hbm [resolvable:$true] %s83
      %s85 = sshll.u32 [#allocation10], 4
      %s86 = int_to_ptr.vmem [resolvable:$true] %s85
      %91 = dma.hbm_to_vmem [thread:$0]  %s84, 1024, %s86, [#allocation9], 64, 64, 4
    $region29: #{tpu_custom_call.1} parent=1 // pred_fallthru
      _
    // Predicated region
    $region30: #{tpu_custom_call.1} parent=1 // pred_check
      _
    $region31: #{tpu_custom_call.1} parent=1 // pred_check_branch
      %93 = sbr.rel (0) target = $region33
    $region32: #{tpu_custom_call.1} parent=1 // pred_region
      _
    $region33: #{tpu_custom_call.1} parent=1 // pred_fallthru
      _
    // Predicated region
    $region34: #{tpu_custom_call.1} parent=1 // pred_check
      _
    $region35: #{tpu_custom_call.1} parent=1 // pred_check_branch
      %95 = sbr.rel (0) target = $region37
    $region36: #{tpu_custom_call.1} parent=1 // pred_region
      %97 = vsyncadd [#allocation12], 0
      %s98 = sshll.u32 %s8, 4
      %s99 = int_to_ptr.hbm [resolvable:$true] %s98
      %s100 = sshll.u32 [#allocation11], 4
      %s101 = int_to_ptr.vmem [resolvable:$true] %s100
      %106 = dma.hbm_to_vmem [thread:$0]  %s99, 1024, %s101, [#allocation12], 64, 64, 4
    $region37: #{tpu_custom_call.1} parent=1 // pred_fallthru
      _
    // Predicated region
    $region38: #{tpu_custom_call.1} parent=1 // pred_check
      _
    $region39: #{tpu_custom_call.1} parent=1 // pred_check_branch
      %108 = sbr.rel (0) target = $region41
    $region40: #{tpu_custom_call.1} parent=1 // pred_region
      _
    $region41: #{tpu_custom_call.1} parent=1 // pred_fallthru
      _
    // Predicated region
    $region42: #{tpu_custom_call.1} parent=1 // pred_check
      _
    $region43: #{tpu_custom_call.1} parent=1 // pred_check_branch
      %110 = sbr.rel (0) target = $region45
    $region44: #{tpu_custom_call.1} parent=1 // pred_region
      _
    $region45: #{tpu_custom_call.1} parent=1 // pred_fallthru
      _
    // Predicated region
    $region46: #{tpu_custom_call.1} parent=1 // pred_check
      _
    $region47: #{tpu_custom_call.1} parent=1 // pred_check_branch
      %112 = sbr.rel (0) target = $region49
    $region48: #{tpu_custom_call.1} parent=1 // pred_region
      _
    $region49: #{tpu_custom_call.1} parent=1 // pred_fallthru
      _
    // Predicated region
    $region50: #{tpu_custom_call.1} parent=1 // pred_check
      _
    $region51: #{tpu_custom_call.1} parent=1 // pred_check_branch
      %114 = sbr.rel (0) target = $region53
    $region52: #{tpu_custom_call.1} parent=1 // pred_region
      _
    $region53: #{tpu_custom_call.1} parent=1 // pred_fallthru
      _
    // Predicated region
    $region54: #{tpu_custom_call.1} parent=1 // pred_check
      _
    $region55: #{tpu_custom_call.1} parent=1 // pred_check_branch
      %116 = sbr.rel (0) target = $region57
    $region56: #{tpu_custom_call.1} parent=1 // pred_region
      _
    $region57: #{tpu_custom_call.1} parent=1 // pred_fallthru
      _
    // Predicated region
    $region58: #{tpu_custom_call.1} parent=1 // pred_check
      _
    $region59: #{tpu_custom_call.1} parent=1 // pred_check_branch
      %118 = sbr.rel (0) target = $region61
    $region60: #{tpu_custom_call.1} parent=1 // pred_region
      %120 = dma.done [#allocation3], 128
    $region61: #{tpu_custom_call.1} parent=1 // pred_fallthru
      _
    // Predicated region
    $region62: #{tpu_custom_call.1} parent=1 // pred_check
      _
    $region63: #{tpu_custom_call.1} parent=1 // pred_check_branch
      %122 = sbr.rel (0) target = $region65
    $region64: #{tpu_custom_call.1} parent=1 // pred_region
      %124 = dma.done [#allocation6], 128
    $region65: #{tpu_custom_call.1} parent=1 // pred_fallthru
      _
    // Predicated region
    $region66: #{tpu_custom_call.1} parent=1 // pred_check
      _
    $region67: #{tpu_custom_call.1} parent=1 // pred_check_branch
      %126 = sbr.rel (0) target = $region69
    $region68: #{tpu_custom_call.1} parent=1 // pred_region
      %128 = dma.done [#allocation6], 1024
    $region69: #{tpu_custom_call.1} parent=1 // pred_fallthru
      _
    // Predicated region
    $region70: #{tpu_custom_call.1} parent=1 // pred_check
      _
    $region71: #{tpu_custom_call.1} parent=1 // pred_check_branch
      %130 = sbr.rel (0) target = $region73
    $region72: #{tpu_custom_call.1} parent=1 // pred_region
      %132 = dma.done [#allocation9], 1024
    $region73: #{tpu_custom_call.1} parent=1 // pred_fallthru
      _
    // Predicated region
    $region74: #{tpu_custom_call.1} parent=1 // pred_check
      _
    $region75: #{tpu_custom_call.1} parent=1 // pred_check_branch
      %134 = sbr.rel (0) target = $region77
    $region76: #{tpu_custom_call.1} parent=1 // pred_region
      %136 = dma.done [#allocation9], 1024
    $region77: #{tpu_custom_call.1} parent=1 // pred_fallthru
      _
    // Predicated region
    $region78: #{tpu_custom_call.1} parent=1 // pred_check
      _
    $region79: #{tpu_custom_call.1} parent=1 // pred_check_branch
      %138 = sbr.rel (0) target = $region81
    $region80: #{tpu_custom_call.1} parent=1 // pred_region
      %140 = dma.done [#allocation12], 1024
    $region81: #{tpu_custom_call.1} parent=1 // pred_fallthru
      _
    %v141 = vld [vmem:[#allocation2] sm:$0xff]
    %v142 = vld [vmem:[#allocation5] sm:$0xff]
    %v143 = vpack.c.bf16 %v141, %v141
    %v144 = vld [vmem:[#allocation7] sm:$0xf]
    %v145 = vld [vmem:[#allocation7 + $0x4] sm:$0xf]
    %v146 = vld [vmem:[#allocation7 + $0x8] sm:$0xf]
    %v147 = vld [vmem:[#allocation7 + $0xc] sm:$0xf]
    %v148 = vld [vmem:[#allocation7 + $0x10] sm:$0xf]
    %v149 = vld [vmem:[#allocation7 + $0x14] sm:$0xf]
    %v150 = vld [vmem:[#allocation7 + $0x18] sm:$0xf]
    %v151 = vld [vmem:[#allocation7 + $0x1c] sm:$0xf]
    %v152 = vld [vmem:[#allocation7 + $0x20] sm:$0xf]
    %v153 = vld [vmem:[#allocation7 + $0x24] sm:$0xf]
    %v154 = vld [vmem:[#allocation7 + $0x28] sm:$0xf]
    %v155 = vld [vmem:[#allocation7 + $0x2c] sm:$0xf]
    %v156 = vld [vmem:[#allocation7 + $0x30] sm:$0xf]
    %v157 = vld [vmem:[#allocation7 + $0x34] sm:$0xf]
    %v158 = vld [vmem:[#allocation7 + $0x38] sm:$0xf]
    %v159 = vld [vmem:[#allocation7 + $0x3c] sm:$0xf]
    %v160 = vld [vmem:[%s3] sm:$0x1]
    %v162 = vperm.slane %v160, 0
    %v180 = vunpack.c.l.b16 %v144
    %v181 = vunpack.c.l.b16 %v145
    %v182 = vunpack.c.l.b16 %v146
    %v183 = vunpack.c.l.b16 %v147
    %v184 = vunpack.c.l.b16 %v148
    %v185 = vunpack.c.l.b16 %v149
    %v186 = vunpack.c.l.b16 %v150
    %v187 = vunpack.c.l.b16 %v151
    %v188 = vunpack.c.l.b16 %v152
    %v189 = vunpack.c.l.b16 %v153
    %v190 = vunpack.c.l.b16 %v154
    %v191 = vunpack.c.l.b16 %v155
    %v192 = vunpack.c.l.b16 %v156
    %v193 = vunpack.c.l.b16 %v157
    %v194 = vunpack.c.l.b16 %v158
    %v195 = vunpack.c.l.b16 %v159
    %v196 = vpack.c.b16 %v181, %v180
    %v197 = vpack.c.b16 %v183, %v182
    %v198 = vpack.c.b16 %v185, %v184
    %v199 = vpack.c.b16 %v187, %v186
    %v200 = vpack.c.b16 %v189, %v188
    %v201 = vpack.c.b16 %v191, %v190
    %v202 = vpack.c.b16 %v193, %v192
    %v203 = vpack.c.b16 %v195, %v194
    %212 = vmatpush.bf16.msra.mxu0 %v203
    %213 = vmatpush.bf16.msra.mxu0 %v202
    %214 = vmatpush.bf16.msra.mxu0 %v201
    %215 = vmatpush.bf16.msra.mxu0 %v200
    %216 = vmatpush.bf16.msra.mxu0 %v199
    %217 = vmatpush.bf16.msra.mxu0 %v198
    %218 = vmatpush.bf16.msra.mxu0 %v197
    %219 = vmatpush.bf16.msra.mxu0 %v196
    %220 = vmatmul.bf16.gmra.mxu0 %v143
    %v221 = vpop.f32.mrf.mxu0
    %v222 = vadd.f32 %v162, %v221
    %v223 = vpop.f32.mrf.mxu0
    %224 = vdwg.mxu0
    %v225 = vmax.f32 %v222, 0.0
    %v226 = vpack.c.bf16 %v225, %v225
    %v227 = vld [vmem:[#allocation8] sm:$0xf]
    %v228 = vld [vmem:[#allocation8 + $0x4] sm:$0xf]
    %v229 = vld [vmem:[#allocation8 + $0x8] sm:$0xf]
    %v230 = vld [vmem:[#allocation8 + $0xc] sm:$0xf]
    %v231 = vld [vmem:[#allocation8 + $0x10] sm:$0xf]
    %v232 = vld [vmem:[#allocation8 + $0x14] sm:$0xf]
    %v233 = vld [vmem:[#allocation8 + $0x18] sm:$0xf]
    %v234 = vld [vmem:[#allocation8 + $0x1c] sm:$0xf]
    %v235 = vld [vmem:[#allocation8 + $0x20] sm:$0xf]
    %v236 = vld [vmem:[#allocation8 + $0x24] sm:$0xf]
    %v237 = vld [vmem:[#allocation8 + $0x28] sm:$0xf]
    %v238 = vld [vmem:[#allocation8 + $0x2c] sm:$0xf]
    %v239 = vld [vmem:[#allocation8 + $0x30] sm:$0xf]
    %v240 = vld [vmem:[#allocation8 + $0x34] sm:$0xf]
    %v241 = vld [vmem:[#allocation8 + $0x38] sm:$0xf]
    %v242 = vld [vmem:[#allocation8 + $0x3c] sm:$0xf]
    %v243 = vld [vmem:[%s5] sm:$0x1]
    %v245 = vperm.slane %v243, 0
    %v263 = vunpack.c.l.b16 %v227
    %v264 = vunpack.c.l.b16 %v228
    %v265 = vunpack.c.l.b16 %v229
    %v266 = vunpack.c.l.b16 %v230
    %v267 = vunpack.c.l.b16 %v231
    %v268 = vunpack.c.l.b16 %v232
    %v269 = vunpack.c.l.b16 %v233
    %v270 = vunpack.c.l.b16 %v234
    %v271 = vunpack.c.l.b16 %v235
    %v272 = vunpack.c.l.b16 %v236
    %v273 = vunpack.c.l.b16 %v237
    %v274 = vunpack.c.l.b16 %v238
    %v275 = vunpack.c.l.b16 %v239
    %v276 = vunpack.c.l.b16 %v240
    %v277 = vunpack.c.l.b16 %v241
    %v278 = vunpack.c.l.b16 %v242
    %v279 = vpack.c.b16 %v264, %v263
    %v280 = vpack.c.b16 %v266, %v265
    %v281 = vpack.c.b16 %v268, %v267
    %v282 = vpack.c.b16 %v270, %v269
    %v283 = vpack.c.b16 %v272, %v271
    %v284 = vpack.c.b16 %v274, %v273
    %v285 = vpack.c.b16 %v276, %v275
    %v286 = vpack.c.b16 %v278, %v277
    %295 = vmatpush.bf16.msra.mxu0 %v286
    %296 = vmatpush.bf16.msra.mxu0 %v285
    %297 = vmatpush.bf16.msra.mxu0 %v284
    %298 = vmatpush.bf16.msra.mxu0 %v283
    %299 = vmatpush.bf16.msra.mxu0 %v282
    %300 = vmatpush.bf16.msra.mxu0 %v281
    %301 = vmatpush.bf16.msra.mxu0 %v280
    %302 = vmatpush.bf16.msra.mxu0 %v279
    %303 = vmatmul.bf16.gmra.mxu0 %v226
    %v304 = vpop.f32.mrf.mxu0
    %v305 = vadd.f32 %v245, %v304
    %v306 = vpop.f32.mrf.mxu0
    %307 = vdwg.mxu0
    %v308 = vadd.f32 %v305, %v141
    %v309 = vpack.c.bf16 %v142, %v142
    %v310 = vld [vmem:[#allocation10] sm:$0xf]
    %v311 = vld [vmem:[#allocation10 + $0x4] sm:$0xf]
    %v312 = vld [vmem:[#allocation10 + $0x8] sm:$0xf]
    %v313 = vld [vmem:[#allocation10 + $0xc] sm:$0xf]
    %v314 = vld [vmem:[#allocation10 + $0x10] sm:$0xf]
    %v315 = vld [vmem:[#allocation10 + $0x14] sm:$0xf]
    %v316 = vld [vmem:[#allocation10 + $0x18] sm:$0xf]
    %v317 = vld [vmem:[#allocation10 + $0x1c] sm:$0xf]
    %v318 = vld [vmem:[#allocation10 + $0x20] sm:$0xf]
    %v319 = vld [vmem:[#allocation10 + $0x24] sm:$0xf]
    %v320 = vld [vmem:[#allocation10 + $0x28] sm:$0xf]
    %v321 = vld [vmem:[#allocation10 + $0x2c] sm:$0xf]
    %v322 = vld [vmem:[#allocation10 + $0x30] sm:$0xf]
    %v323 = vld [vmem:[#allocation10 + $0x34] sm:$0xf]
    %v324 = vld [vmem:[#allocation10 + $0x38] sm:$0xf]
    %v325 = vld [vmem:[#allocation10 + $0x3c] sm:$0xf]
    %v326 = vld [vmem:[%s7] sm:$0x1]
    %v328 = vperm.slane %v326, 0
    %v346 = vunpack.c.l.b16 %v310
    %v347 = vunpack.c.l.b16 %v311
    %v348 = vunpack.c.l.b16 %v312
    %v349 = vunpack.c.l.b16 %v313
    %v350 = vunpack.c.l.b16 %v314
    %v351 = vunpack.c.l.b16 %v315
    %v352 = vunpack.c.l.b16 %v316
    %v353 = vunpack.c.l.b16 %v317
    %v354 = vunpack.c.l.b16 %v318
    %v355 = vunpack.c.l.b16 %v319
    %v356 = vunpack.c.l.b16 %v320
    %v357 = vunpack.c.l.b16 %v321
    %v358 = vunpack.c.l.b16 %v322
    %v359 = vunpack.c.l.b16 %v323
    %v360 = vunpack.c.l.b16 %v324
    %v361 = vunpack.c.l.b16 %v325
    %v362 = vpack.c.b16 %v347, %v346
    %v363 = vpack.c.b16 %v349, %v348
    %v364 = vpack.c.b16 %v351, %v350
    %v365 = vpack.c.b16 %v353, %v352
    %v366 = vpack.c.b16 %v355, %v354
    %v367 = vpack.c.b16 %v357, %v356
    %v368 = vpack.c.b16 %v359, %v358
    %v369 = vpack.c.b16 %v361, %v360
    %378 = vmatpush.bf16.msra.mxu0 %v369
    %379 = vmatpush.bf16.msra.mxu0 %v368
    %380 = vmatpush.bf16.msra.mxu0 %v367
    %381 = vmatpush.bf16.msra.mxu0 %v366
    %382 = vmatpush.bf16.msra.mxu0 %v365
    %383 = vmatpush.bf16.msra.mxu0 %v364
    %384 = vmatpush.bf16.msra.mxu0 %v363
    %385 = vmatpush.bf16.msra.mxu0 %v362
    %386 = vmatmul.bf16.gmra.mxu0 %v309
    %v387 = vpop.f32.mrf.mxu0
    %v388 = vadd.f32 %v328, %v387
    %v389 = vpop.f32.mrf.mxu0
    %390 = vdwg.mxu0
    %v391 = vmax.f32 %v388, 0.0
    %v392 = vpack.c.bf16 %v391, %v391
    %v393 = vld [vmem:[#allocation11] sm:$0xf]
    %v394 = vld [vmem:[#allocation11 + $0x4] sm:$0xf]
    %v395 = vld [vmem:[#allocation11 + $0x8] sm:$0xf]
    %v396 = vld [vmem:[#allocation11 + $0xc] sm:$0xf]
    %v397 = vld [vmem:[#allocation11 + $0x10] sm:$0xf]
    %v398 = vld [vmem:[#allocation11 + $0x14] sm:$0xf]
    %v399 = vld [vmem:[#allocation11 + $0x18] sm:$0xf]
    %v400 = vld [vmem:[#allocation11 + $0x1c] sm:$0xf]
    %v401 = vld [vmem:[#allocation11 + $0x20] sm:$0xf]
    %v402 = vld [vmem:[#allocation11 + $0x24] sm:$0xf]
    %v403 = vld [vmem:[#allocation11 + $0x28] sm:$0xf]
    %v404 = vld [vmem:[#allocation11 + $0x2c] sm:$0xf]
    %v405 = vld [vmem:[#allocation11 + $0x30] sm:$0xf]
    %v406 = vld [vmem:[#allocation11 + $0x34] sm:$0xf]
    %v407 = vld [vmem:[#allocation11 + $0x38] sm:$0xf]
    %v408 = vld [vmem:[#allocation11 + $0x3c] sm:$0xf]
    %v409 = vld [vmem:[%s9] sm:$0x1]
    %v411 = vperm.slane %v409, 0
    %v429 = vunpack.c.l.b16 %v393
    %v430 = vunpack.c.l.b16 %v394
    %v431 = vunpack.c.l.b16 %v395
    %v432 = vunpack.c.l.b16 %v396
    %v433 = vunpack.c.l.b16 %v397
    %v434 = vunpack.c.l.b16 %v398
    %v435 = vunpack.c.l.b16 %v399
    %v436 = vunpack.c.l.b16 %v400
    %v437 = vunpack.c.l.b16 %v401
    %v438 = vunpack.c.l.b16 %v402
    %v439 = vunpack.c.l.b16 %v403
    %v440 = vunpack.c.l.b16 %v404
    %v441 = vunpack.c.l.b16 %v405
    %v442 = vunpack.c.l.b16 %v406
    %v443 = vunpack.c.l.b16 %v407
    %v444 = vunpack.c.l.b16 %v408
    %v445 = vpack.c.b16 %v430, %v429
    %v446 = vpack.c.b16 %v432, %v431
    %v447 = vpack.c.b16 %v434, %v433
    %v448 = vpack.c.b16 %v436, %v435
    %v449 = vpack.c.b16 %v438, %v437
    %v450 = vpack.c.b16 %v440, %v439
    %v451 = vpack.c.b16 %v442, %v441
    %v452 = vpack.c.b16 %v444, %v443
    %461 = vmatpush.bf16.msra.mxu0 %v452
    %462 = vmatpush.bf16.msra.mxu0 %v451
    %463 = vmatpush.bf16.msra.mxu0 %v450
    %464 = vmatpush.bf16.msra.mxu0 %v449
    %465 = vmatpush.bf16.msra.mxu0 %v448
    %466 = vmatpush.bf16.msra.mxu0 %v447
    %467 = vmatpush.bf16.msra.mxu0 %v446
    %468 = vmatpush.bf16.msra.mxu0 %v445
    %469 = vmatmul.bf16.gmra.mxu0 %v392
    %v470 = vpop.f32.mrf.mxu0
    %v471 = vadd.f32 %v411, %v470
    %v472 = vpop.f32.mrf.mxu0
    %473 = vdwg.mxu0
    %v474 = vadd.f32 %v471, %v142
    %475 = vadd.xlane.f32.xlu0 %v308
    %v476 = vpop.xlane.xlu0 %475
    %477 = vadd.xlane.f32.xlu0 %v474
    %v478 = vpop.xlane.xlu0 %477
    %v479 = vadd.f32 %v476, %v478
    %v480 = vmul.f32 %v479, 0.03125
    %v481 = vsub.f32 %v308, %v480
    %v482 = vsub.f32 %v474, %v480
    %v483 = vmul.f32 %v481, %v481
    %484 = vadd.xlane.f32.xlu0 %v483
    %v485 = vpop.xlane.xlu0 %484
    %v486 = vmul.f32 %v482, %v482
    %487 = vadd.xlane.f32.xlu0 %v486
    %v488 = vpop.xlane.xlu0 %487
    %v489 = vadd.f32 %v485, %v488
    %v490 = vmul.f32 %v480, %v480
    %v491 = vmul.f32 %v490, 224.0
    %v492 = vsub.f32 %v489, %v491
    %v493 = vmul.f32 %v492, 0.032258064
    %v494 = vrsqrt.pop %v493
    %v495 = vmul.f32 %v494, %v493
    %v496 = vmul.f32 %v495, %v494
    %v497 = vmul.f32 0.5, %v496
    %v498 = vsub.f32 1.5, %v497
    %v499 = vmul.f32 %v494, %v498
    %v500 = vmul.f32 %v493, %v499
    %vm501 = vcmp.eq.f32.partialorder %v493, inf
    %v502 = vsel %vm501, %v493, %v500
    %vm503 = vcmp.eq.f32.partialorder %v493, 0.0
    %v504 = vand.u32 %v493, 2147483648
    %v505 = vsel %vm503, %v504, %v502
    %v506 = vadd.f32 %v505, 0.001
    %v507 = vrcp.pop %v506
    %v508 = vmul.f32 %v506, %v507
    %v509 = vsub.f32 2.0, %v508
    %v510 = vmul.f32 %v507, %v509
    %v511 = vmul.f32 %v481, %v510
    %v512 = vld [vmem:[%s10] sm:$0x1]
    %v514 = vperm.slane %v512, 0
    %v516 = vmul.f32 %v511, %v514
    %v517 = vld [vmem:[%s11] sm:$0x1]
    %v519 = vperm.slane %v517, 0
    %v521 = vadd.f32 %v516, %v519
    %522 = vst [vmem:[#allocation13] sm:$0xff] %v521
    %v523 = vmul.f32 %v482, %v510
    %v524 = vld [vmem:[%s12] sm:$0x1]
    %v526 = vperm.slane %v524, 0
    %v528 = vmul.f32 %v523, %v526
    %v529 = vld [vmem:[%s13] sm:$0x1]
    %v531 = vperm.slane %v529, 0
    %v533 = vadd.f32 %v528, %v531
    %534 = vst [vmem:[#allocation14] sm:$0xff] %v533
    // Predicated region
    $region82: #{tpu_custom_call.1} parent=1 // pred_check
      _
    $region83: #{tpu_custom_call.1} parent=1 // pred_check_branch
      %536 = sbr.rel (0) target = $region85
    $region84: #{tpu_custom_call.1} parent=1 // pred_region
      %538 = vsyncadd [#allocation4], 0
      %s540 = sshll.u32 [#allocation13], 4
      %s541 = int_to_ptr.vmem [resolvable:$true] %s540
      %s542 = sshll.u32 %s14, 4
      %s543 = int_to_ptr.hbm [resolvable:$true] %s542
      %545 = dma.vmem_to_hbm [thread:$0]  %s541, 128, %s543, [#allocation4]
    $region85: #{tpu_custom_call.1} parent=1 // pred_fallthru
      _
    // Predicated region
    $region86: #{tpu_custom_call.1} parent=1 // pred_check
      _
    $region87: #{tpu_custom_call.1} parent=1 // pred_check_branch
      %547 = sbr.rel (0) target = $region89
    $region88: #{tpu_custom_call.1} parent=1 // pred_region
      %549 = vsyncadd [#allocation15], 0
      %s551 = sshll.u32 [#allocation14], 4
      %s552 = int_to_ptr.vmem [resolvable:$true] %s551
      %s553 = sshll.u32 %s15, 4
      %s554 = int_to_ptr.hbm [resolvable:$true] %s553
      %556 = dma.vmem_to_hbm [thread:$0]  %s552, 128, %s554, [#allocation15]
    $region89: #{tpu_custom_call.1} parent=1 // pred_fallthru
      _
    // Predicated region
    $region90: #{tpu_custom_call.1} parent=1 // pred_check
      _
    $region91: #{tpu_custom_call.1} parent=1 // pred_check_branch
      %558 = sbr.rel (0) target = $region93
    $region92: #{tpu_custom_call.1} parent=1 // pred_region
      %560 = dma.done [#allocation4], 128
    $region93: #{tpu_custom_call.1} parent=1 // pred_fallthru
      _
    // Predicated region
    $region94: #{tpu_custom_call.1} parent=1 // pred_check
      _
    $region95: #{tpu_custom_call.1} parent=1 // pred_check_branch
      %562 = sbr.rel (0) target = $region97
    $region96: #{tpu_custom_call.1} parent=1 // pred_region
      %564 = dma.done [#allocation15], 128
    $region97: #{tpu_custom_call.1} parent=1 // pred_fallthru
      _
    %565 = vsyncpa [#allocation3], 1
    %566 = vsyncpa [#allocation6], 1
    %567 = vsyncpa [#allocation9], 1
    %568 = vsyncpa [#allocation12], 1
    %569 = vsyncpa [#allocation4], 1
    %570 = vsyncpa [#allocation15], 1

// kernel: tpu_custom_call.1
$region0: #{tpu_custom_call.1}
  #allocation0 [shape = 'u32[]', space=smem, size = 0x4, offset = 0x4, fixed_abs, tag = 'smem constant byte address 0x4 - core index']
  #allocation1 [shape = 'u32[72,128]{1,0:T(1,128)}', space=vmem, size = 0x9000, scoped, tag = 'internal scratch']
  %s0 = inlined_call_operand.hbm [shape: f32[8,128], index: 0, kind: input, shape index: {}]
  %s1 = inlined_call_operand.hbm [shape: f32[8,128], index: 1, kind: input, shape index: {}]
  %s2 = inlined_call_operand.hbm [shape: bf16[128,128], index: 2, kind: input, shape index: {}]
  %s3 = inlined_call_operand.vmem [shape: f32[1,128], index: 3, kind: input, shape index: {}]
  %s4 = inlined_call_operand.hbm [shape: bf16[128,128], index: 4, kind: input, shape index: {}]
  %s5 = inlined_call_operand.vmem [shape: f32[1,128], index: 5, kind: input, shape index: {}]
  %s6 = inlined_call_operand.hbm [shape: bf16[128,128], index: 6, kind: input, shape index: {}]
  %s7 = inlined_call_operand.vmem [shape: f32[1,128], index: 7, kind: input, shape index: {}]
  %s8 = inlined_call_operand.hbm [shape: bf16[128,128], index: 8, kind: input, shape index: {}]
  %s9 = inlined_call_operand.vmem [shape: f32[1,128], index: 9, kind: input, shape index: {}]
  %s10 = inlined_call_operand.vmem [shape: f32[1,128], index: 10, kind: input, shape index: {}]
  %s11 = inlined_call_operand.vmem [shape: f32[1,128], index: 11, kind: input, shape index: {}]
  %s12 = inlined_call_operand.vmem [shape: f32[1,128], index: 12, kind: input, shape index: {}]
  %s13 = inlined_call_operand.vmem [shape: f32[1,128], index: 13, kind: input, shape index: {}]
  %s14 = inlined_call_operand.hbm [shape: f32[8,128], index: 14, kind: output, shape index: {0}]
  %s15 = inlined_call_operand.hbm [shape: f32[8,128], index: 15, kind: output, shape index: {1}]
  %16 = xla_tuple %s14, %s15
  %s17 = sld [smem:[#allocation0]]
  $region98: #{tpu_custom_call.1} parent=0
    _
  %s19 = ssub.s32 1, %s17
  %s20 = scalar_select 0, %s19, %s17
  $region1: #{tpu_custom_call.1} parent=0
    #allocation2 [shape = 'u8[4096]{0}', space=vmem, size = 0x1000, scoped, tag = 'input window, operand 0, single buffered']
    #allocation3 [shape = 's32[1]{0}', space=sflag, size = 0x4, scoped, tag = 'scoped memory for tpu_custom_call.1']
    #allocation4 [shape = 's32[1]{0}', space=sflag, size = 0x4, scoped, tag = 'scoped memory for tpu_custom_call.1']
    #allocation5 [shape = 'u8[4096]{0}', space=vmem, size = 0x1000, scoped, tag = 'input window, operand 1, single buffered']
    #allocation6 [shape = 's32[1]{0}', space=sflag, size = 0x4, scoped, tag = 'scoped memory for tpu_custom_call.1']
    #allocation7 [shape = 'u8[32768]{0}', space=vmem, size = 0x8000, scoped, tag = 'input window, operand 2, single buffered']
    #allocation8 [shape = 'u8[32768]{0}', space=vmem, size = 0x8000, scoped, tag = 'input window, operand 4, single buffered']
    #allocation9 [shape = 's32[1]{0}', space=sflag, size = 0x4, scoped, tag = 'scoped memory for tpu_custom_call.1']
    #allocation10 [shape = 'u8[32768]{0}', space=vmem, size = 0x8000, scoped, tag = 'input window, operand 6, single buffered']
    #allocation11 [shape = 'u8[32768]{0}', space=vmem, size = 0x8000, scoped, tag = 'input window, operand 8, single buffered']
    #allocation12 [shape = 's32[1]{0}', space=sflag, size = 0x4, scoped, tag = 'scoped memory for tpu_custom_call.1']
    #allocation13 [shape = 'u8[4096]{0}', space=vmem, size = 0x1000, scoped, tag = 'output window, operand 0, single buffered']
    #allocation14 [shape = 'u8[4096]{0}', space=vmem, size = 0x1000, scoped, tag = 'output window, operand 1, single buffered']
    #allocation15 [shape = 's32[1]{0}', space=sflag, size = 0x4, scoped, tag = 'scoped memory for tpu_custom_call.1']
    %21 = vsyncpa [#allocation3], 0
    %22 = vsyncpa [#allocation6], 0
    %23 = vsyncpa [#allocation9], 0
    %24 = vsyncpa [#allocation12], 0
    %25 = vsyncpa [#allocation4], 0
    %26 = vsyncpa [#allocation15], 0
    // Predicated region
    $region2: #{tpu_custom_call.1} parent=1 // pred_check
      _
    $region3: #{tpu_custom_call.1} parent=1 // pred_check_branch
      %28 = sbr.rel (0) target = $region5
    $region4: #{tpu_custom_call.1} parent=1 // pred_region
      %30 = vsyncadd [#allocation3], 0
      %s32 = sshll.u32 %s0, 4
      %s33 = int_to_ptr.hbm [resolvable:$true] %s32
      %s34 = sshll.u32 [#allocation2], 4
      %s35 = int_to_ptr.vmem [resolvable:$true] %s34
      %37 = dma.hbm_to_vmem [thread:$0]  %s33, 128, %s35, [#allocation3]
    $region5: #{tpu_custom_call.1} parent=1 // pred_fallthru
      _
    // Predicated region
    $region6: #{tpu_custom_call.1} parent=1 // pred_check
      _
    $region7: #{tpu_custom_call.1} parent=1 // pred_check_branch
      %39 = sbr.rel (0) target = $region9
    $region8: #{tpu_custom_call.1} parent=1 // pred_region
      %41 = vsyncadd [#allocation6], 0
      %s43 = sshll.u32 %s1, 4
      %s44 = int_to_ptr.hbm [resolvable:$true] %s43
      %s45 = sshll.u32 [#allocation5], 4
      %s46 = int_to_ptr.vmem [resolvable:$true] %s45
      %48 = dma.hbm_to_vmem [thread:$0]  %s44, 128, %s46, [#allocation6]
    $region9: #{tpu_custom_call.1} parent=1 // pred_fallthru
      _
    // Predicated region
    $region10: #{tpu_custom_call.1} parent=1 // pred_check
      _
    $region11: #{tpu_custom_call.1} parent=1 // pred_check_branch
      %50 = sbr.rel (0) target = $region13
    $region12: #{tpu_custom_call.1} parent=1 // pred_region
      %52 = vsyncadd [#allocation6], 0
      %s53 = sshll.u32 %s2, 4
      %s54 = int_to_ptr.hbm [resolvable:$true] %s53
      %s55 = sshll.u32 [#allocation7], 4
      %s56 = int_to_ptr.vmem [resolvable:$true] %s55
      %61 = dma.hbm_to_vmem [thread:$0]  %s54, 1024, %s56, [#allocation6], 64, 64, 4
    $region13: #{tpu_custom_call.1} parent=1 // pred_fallthru
      _
    // Predicated region
    $region14: #{tpu_custom_call.1} parent=1 // pred_check
      _
    $region15: #{tpu_custom_call.1} parent=1 // pred_check_branch
      %63 = sbr.rel (0) target = $region17
    $region16: #{tpu_custom_call.1} parent=1 // pred_region
      _
    $region17: #{tpu_custom_call.1} parent=1 // pred_fallthru
      _
    // Predicated region
    $region18: #{tpu_custom_call.1} parent=1 // pred_check
      _
    $region19: #{tpu_custom_call.1} parent=1 // pred_check_branch
      %65 = sbr.rel (0) target = $region21
    $region20: #{tpu_custom_call.1} parent=1 // pred_region
      %67 = vsyncadd [#allocation9], 0
      %s68 = sshll.u32 %s4, 4
      %s69 = int_to_ptr.hbm [resolvable:$true] %s68
      %s70 = sshll.u32 [#allocation8], 4
      %s71 = int_to_ptr.vmem [resolvable:$true] %s70
      %76 = dma.hbm_to_vmem [thread:$0]  %s69, 1024, %s71, [#allocation9], 64, 64, 4
    $region21: #{tpu_custom_call.1} parent=1 // pred_fallthru
      _
    // Predicated region
    $region22: #{tpu_custom_call.1} parent=1 // pred_check
      _
    $region23: #{tpu_custom_call.1} parent=1 // pred_check_branch
      %78 = sbr.rel (0) target = $region25
    $region24: #{tpu_custom_call.1} parent=1 // pred_region
      _
    $region25: #{tpu_custom_call.1} parent=1 // pred_fallthru
      _
    // Predicated region
    $region26: #{tpu_custom_call.1} parent=1 // pred_check
      _
    $region27: #{tpu_custom_call.1} parent=1 // pred_check_branch
      %80 = sbr.rel (0) target = $region29
    $region28: #{tpu_custom_call.1} parent=1 // pred_region
      %82 = vsyncadd [#allocation9], 0
      %s83 = sshll.u32 %s6, 4
      %s84 = int_to_ptr.hbm [resolvable:$true] %s83
      %s85 = sshll.u32 [#allocation10], 4
      %s86 = int_to_ptr.vmem [resolvable:$true] %s85
      %91 = dma.hbm_to_vmem [thread:$0]  %s84, 1024, %s86, [#allocation9], 64, 64, 4
    $region29: #{tpu_custom_call.1} parent=1 // pred_fallthru
      _
    // Predicated region
    $region30: #{tpu_custom_call.1} parent=1 // pred_check
      _
    $region31: #{tpu_custom_call.1} parent=1 // pred_check_branch
      %93 = sbr.rel (0) target = $region33
    $region32: #{tpu_custom_call.1} parent=1 // pred_region
      _
    $region33: #{tpu_custom_call.1} parent=1 // pred_fallthru
      _
    // Predicated region
    $region34: #{tpu_custom_call.1} parent=1 // pred_check
      _
    $region35: #{tpu_custom_call.1} parent=1 // pred_check_branch
      %95 = sbr.rel (0) target = $region37
    $region36: #{tpu_custom_call.1} parent=1 // pred_region
      %97 = vsyncadd [#allocation12], 0
      %s98 = sshll.u32 %s8, 4
      %s99 = int_to_ptr.hbm [resolvable:$true] %s98
      %s100 = sshll.u32 [#allocation11], 4
      %s101 = int_to_ptr.vmem [resolvable:$true] %s100
      %106 = dma.hbm_to_vmem [thread:$0]  %s99, 1024, %s101, [#allocation12], 64, 64, 4
    $region37: #{tpu_custom_call.1} parent=1 // pred_fallthru
      _
    // Predicated region
    $region38: #{tpu_custom_call.1} parent=1 // pred_check
      _
    $region39: #{tpu_custom_call.1} parent=1 // pred_check_branch
      %108 = sbr.rel (0) target = $region41
    $region40: #{tpu_custom_call.1} parent=1 // pred_region
      _
    $region41: #{tpu_custom_call.1} parent=1 // pred_fallthru
      _
    // Predicated region
    $region42: #{tpu_custom_call.1} parent=1 // pred_check
      _
    $region43: #{tpu_custom_call.1} parent=1 // pred_check_branch
      %110 = sbr.rel (0) target = $region45
    $region44: #{tpu_custom_call.1} parent=1 // pred_region
      _
    $region45: #{tpu_custom_call.1} parent=1 // pred_fallthru
      _
    // Predicated region
    $region46: #{tpu_custom_call.1} parent=1 // pred_check
      _
    $region47: #{tpu_custom_call.1} parent=1 // pred_check_branch
      %112 = sbr.rel (0) target = $region49
    $region48: #{tpu_custom_call.1} parent=1 // pred_region
      _
    $region49: #{tpu_custom_call.1} parent=1 // pred_fallthru
      _
    // Predicated region
    $region50: #{tpu_custom_call.1} parent=1 // pred_check
      _
    $region51: #{tpu_custom_call.1} parent=1 // pred_check_branch
      %114 = sbr.rel (0) target = $region53
    $region52: #{tpu_custom_call.1} parent=1 // pred_region
      _
    $region53: #{tpu_custom_call.1} parent=1 // pred_fallthru
      _
    // Predicated region
    $region54: #{tpu_custom_call.1} parent=1 // pred_check
      _
    $region55: #{tpu_custom_call.1} parent=1 // pred_check_branch
      %116 = sbr.rel (0) target = $region57
    $region56: #{tpu_custom_call.1} parent=1 // pred_region
      _
    $region57: #{tpu_custom_call.1} parent=1 // pred_fallthru
      _
    // Predicated region
    $region58: #{tpu_custom_call.1} parent=1 // pred_check
      _
    $region59: #{tpu_custom_call.1} parent=1 // pred_check_branch
      %118 = sbr.rel (0) target = $region61
    $region60: #{tpu_custom_call.1} parent=1 // pred_region
      %120 = dma.done [#allocation3], 128
    $region61: #{tpu_custom_call.1} parent=1 // pred_fallthru
      _
    // Predicated region
    $region62: #{tpu_custom_call.1} parent=1 // pred_check
      _
    $region63: #{tpu_custom_call.1} parent=1 // pred_check_branch
      %122 = sbr.rel (0) target = $region65
    $region64: #{tpu_custom_call.1} parent=1 // pred_region
      %124 = dma.done [#allocation6], 128
    $region65: #{tpu_custom_call.1} parent=1 // pred_fallthru
      _
    // Predicated region
    $region66: #{tpu_custom_call.1} parent=1 // pred_check
      _
    $region67: #{tpu_custom_call.1} parent=1 // pred_check_branch
      %126 = sbr.rel (0) target = $region69
    $region68: #{tpu_custom_call.1} parent=1 // pred_region
      %128 = dma.done [#allocation6], 1024
    $region69: #{tpu_custom_call.1} parent=1 // pred_fallthru
      _
    // Predicated region
    $region70: #{tpu_custom_call.1} parent=1 // pred_check
      _
    $region71: #{tpu_custom_call.1} parent=1 // pred_check_branch
      %130 = sbr.rel (0) target = $region73
    $region72: #{tpu_custom_call.1} parent=1 // pred_region
      %132 = dma.done [#allocation9], 1024
    $region73: #{tpu_custom_call.1} parent=1 // pred_fallthru
      _
    // Predicated region
    $region74: #{tpu_custom_call.1} parent=1 // pred_check
      _
    $region75: #{tpu_custom_call.1} parent=1 // pred_check_branch
      %134 = sbr.rel (0) target = $region77
    $region76: #{tpu_custom_call.1} parent=1 // pred_region
      %136 = dma.done [#allocation9], 1024
    $region77: #{tpu_custom_call.1} parent=1 // pred_fallthru
      _
    // Predicated region
    $region78: #{tpu_custom_call.1} parent=1 // pred_check
      _
    $region79: #{tpu_custom_call.1} parent=1 // pred_check_branch
      %138 = sbr.rel (0) target = $region81
    $region80: #{tpu_custom_call.1} parent=1 // pred_region
      %140 = dma.done [#allocation12], 1024
    $region81: #{tpu_custom_call.1} parent=1 // pred_fallthru
      _
    %v141 = vld [vmem:[#allocation2] sm:$0xff]
    %v142 = vld [vmem:[#allocation5] sm:$0xff]
    %v143 = vpack.c.bf16 %v141, %v141
    %v144 = vld [vmem:[#allocation7] sm:$0xf]
    %v145 = vld [vmem:[#allocation7 + $0x4] sm:$0xf]
    %v146 = vld [vmem:[#allocation7 + $0x8] sm:$0xf]
    %v147 = vld [vmem:[#allocation7 + $0xc] sm:$0xf]
    %v148 = vld [vmem:[#allocation7 + $0x10] sm:$0xf]
    %v149 = vld [vmem:[#allocation7 + $0x14] sm:$0xf]
    %v150 = vld [vmem:[#allocation7 + $0x18] sm:$0xf]
    %v151 = vld [vmem:[#allocation7 + $0x1c] sm:$0xf]
    %v152 = vld [vmem:[#allocation7 + $0x20] sm:$0xf]
    %v153 = vld [vmem:[#allocation7 + $0x24] sm:$0xf]
    %v154 = vld [vmem:[#allocation7 + $0x28] sm:$0xf]
    %v155 = vld [vmem:[#allocation7 + $0x2c] sm:$0xf]
    %v156 = vld [vmem:[#allocation7 + $0x30] sm:$0xf]
    %v157 = vld [vmem:[#allocation7 + $0x34] sm:$0xf]
    %v158 = vld [vmem:[#allocation7 + $0x38] sm:$0xf]
    %v159 = vld [vmem:[#allocation7 + $0x3c] sm:$0xf]
    %v160 = vld [vmem:[%s3] sm:$0x1]
    %v162 = vperm.slane %v160, 0
    %v180 = vunpack.c.l.b16 %v144
    %v181 = vunpack.c.l.b16 %v145
    %v182 = vunpack.c.l.b16 %v146
    %v183 = vunpack.c.l.b16 %v147
    %v184 = vunpack.c.l.b16 %v148
    %v185 = vunpack.c.l.b16 %v149
    %v186 = vunpack.c.l.b16 %v150
    %v187 = vunpack.c.l.b16 %v151
    %v188 = vunpack.c.l.b16 %v152
    %v189 = vunpack.c.l.b16 %v153
    %v190 = vunpack.c.l.b16 %v154
    %v191 = vunpack.c.l.b16 %v155
    %v192 = vunpack.c.l.b16 %v156
    %v193 = vunpack.c.l.b16 %v157
    %v194 = vunpack.c.l.b16 %v158
    %v195 = vunpack.c.l.b16 %v159
    %v196 = vpack.c.b16 %v181, %v180
    %v197 = vpack.c.b16 %v183, %v182
    %v198 = vpack.c.b16 %v185, %v184
    %v199 = vpack.c.b16 %v187, %v186
    %v200 = vpack.c.b16 %v189, %v188
    %v201 = vpack.c.b16 %v191, %v190
    %v202 = vpack.c.b16 %v193, %v192
    %v203 = vpack.c.b16 %v195, %v194
    %212 = vmatpush.bf16.msra.mxu0 %v203
    %213 = vmatpush.bf16.msra.mxu0 %v202
    %214 = vmatpush.bf16.msra.mxu0 %v201
    %215 = vmatpush.bf16.msra.mxu0 %v200
    %216 = vmatpush.bf16.msra.mxu0 %v199
    %217 = vmatpush.bf16.msra.mxu0 %v198
    %218 = vmatpush.bf16.msra.mxu0 %v197
    %219 = vmatpush.bf16.msra.mxu0 %v196
    %220 = vmatmul.bf16.gmra.mxu0 %v143
    %v221 = vpop.f32.mrf.mxu0
    %v222 = vadd.f32 %v162, %v221
    %v223 = vpop.f32.mrf.mxu0
    %224 = vdwg.mxu0
    %v225 = vmax.f32 %v222, 0.0
    %v226 = vpack.c.bf16 %v225, %v225
    %v227 = vld [vmem:[#allocation8] sm:$0xf]
    %v228 = vld [vmem:[#allocation8 + $0x4] sm:$0xf]
    %v229 = vld [vmem:[#allocation8 + $0x8] sm:$0xf]
    %v230 = vld [vmem:[#allocation8 + $0xc] sm:$0xf]
    %v231 = vld [vmem:[#allocation8 + $0x10] sm:$0xf]
    %v232 = vld [vmem:[#allocation8 + $0x14] sm:$0xf]
    %v233 = vld [vmem:[#allocation8 + $0x18] sm:$0xf]
    %v234 = vld [vmem:[#allocation8 + $0x1c] sm:$0xf]
    %v235 = vld [vmem:[#allocation8 + $0x20] sm:$0xf]
    %v236 = vld [vmem:[#allocation8 + $0x24] sm:$0xf]
    %v237 = vld [vmem:[#allocation8 + $0x28] sm:$0xf]
    %v238 = vld [vmem:[#allocation8 + $0x2c] sm:$0xf]
    %v239 = vld [vmem:[#allocation8 + $0x30] sm:$0xf]
    %v240 = vld [vmem:[#allocation8 + $0x34] sm:$0xf]
    %v241 = vld [vmem:[#allocation8 + $0x38] sm:$0xf]
    %v242 = vld [vmem:[#allocation8 + $0x3c] sm:$0xf]
    %v243 = vld [vmem:[%s5] sm:$0x1]
    %v245 = vperm.slane %v243, 0
    %v263 = vunpack.c.l.b16 %v227
    %v264 = vunpack.c.l.b16 %v228
    %v265 = vunpack.c.l.b16 %v229
    %v266 = vunpack.c.l.b16 %v230
    %v267 = vunpack.c.l.b16 %v231
    %v268 = vunpack.c.l.b16 %v232
    %v269 = vunpack.c.l.b16 %v233
    %v270 = vunpack.c.l.b16 %v234
    %v271 = vunpack.c.l.b16 %v235
    %v272 = vunpack.c.l.b16 %v236
    %v273 = vunpack.c.l.b16 %v237
    %v274 = vunpack.c.l.b16 %v238
    %v275 = vunpack.c.l.b16 %v239
    %v276 = vunpack.c.l.b16 %v240
    %v277 = vunpack.c.l.b16 %v241
    %v278 = vunpack.c.l.b16 %v242
    %v279 = vpack.c.b16 %v264, %v263
    %v280 = vpack.c.b16 %v266, %v265
    %v281 = vpack.c.b16 %v268, %v267
    %v282 = vpack.c.b16 %v270, %v269
    %v283 = vpack.c.b16 %v272, %v271
    %v284 = vpack.c.b16 %v274, %v273
    %v285 = vpack.c.b16 %v276, %v275
    %v286 = vpack.c.b16 %v278, %v277
    %295 = vmatpush.bf16.msra.mxu0 %v286
    %296 = vmatpush.bf16.msra.mxu0 %v285
    %297 = vmatpush.bf16.msra.mxu0 %v284
    %298 = vmatpush.bf16.msra.mxu0 %v283
    %299 = vmatpush.bf16.msra.mxu0 %v282
    %300 = vmatpush.bf16.msra.mxu0 %v281
    %301 = vmatpush.bf16.msra.mxu0 %v280
    %302 = vmatpush.bf16.msra.mxu0 %v279
    %303 = vmatmul.bf16.gmra.mxu0 %v226
    %v304 = vpop.f32.mrf.mxu0
    %v305 = vadd.f32 %v245, %v304
    %v306 = vpop.f32.mrf.mxu0
    %307 = vdwg.mxu0
    %v308 = vadd.f32 %v305, %v141
    %v309 = vpack.c.bf16 %v142, %v142
    %v310 = vld [vmem:[#allocation10] sm:$0xf]
    %v311 = vld [vmem:[#allocation10 + $0x4] sm:$0xf]
    %v312 = vld [vmem:[#allocation10 + $0x8] sm:$0xf]
    %v313 = vld [vmem:[#allocation10 + $0xc] sm:$0xf]
    %v314 = vld [vmem:[#allocation10 + $0x10] sm:$0xf]
    %v315 = vld [vmem:[#allocation10 + $0x14] sm:$0xf]
    %v316 = vld [vmem:[#allocation10 + $0x18] sm:$0xf]
    %v317 = vld [vmem:[#allocation10 + $0x1c] sm:$0xf]
    %v318 = vld [vmem:[#allocation10 + $0x20] sm:$0xf]
    %v319 = vld [vmem:[#allocation10 + $0x24] sm:$0xf]
    %v320 = vld [vmem:[#allocation10 + $0x28] sm:$0xf]
    %v321 = vld [vmem:[#allocation10 + $0x2c] sm:$0xf]
    %v322 = vld [vmem:[#allocation10 + $0x30] sm:$0xf]
    %v323 = vld [vmem:[#allocation10 + $0x34] sm:$0xf]
    %v324 = vld [vmem:[#allocation10 + $0x38] sm:$0xf]
    %v325 = vld [vmem:[#allocation10 + $0x3c] sm:$0xf]
    %v326 = vld [vmem:[%s7] sm:$0x1]
    %v328 = vperm.slane %v326, 0
    %v346 = vunpack.c.l.b16 %v310
    %v347 = vunpack.c.l.b16 %v311
    %v348 = vunpack.c.l.b16 %v312
    %v349 = vunpack.c.l.b16 %v313
    %v350 = vunpack.c.l.b16 %v314
    %v351 = vunpack.c.l.b16 %v315
    %v352 = vunpack.c.l.b16 %v316
    %v353 = vunpack.c.l.b16 %v317
    %v354 = vunpack.c.l.b16 %v318
    %v355 = vunpack.c.l.b16 %v319
    %v356 = vunpack.c.l.b16 %v320
    %v357 = vunpack.c.l.b16 %v321
    %v358 = vunpack.c.l.b16 %v322
    %v359 = vunpack.c.l.b16 %v323
    %v360 = vunpack.c.l.b16 %v324
    %v361 = vunpack.c.l.b16 %v325
    %v362 = vpack.c.b16 %v347, %v346
    %v363 = vpack.c.b16 %v349, %v348
    %v364 = vpack.c.b16 %v351, %v350
    %v365 = vpack.c.b16 %v353, %v352
    %v366 = vpack.c.b16 %v355, %v354
    %v367 = vpack.c.b16 %v357, %v356
    %v368 = vpack.c.b16 %v359, %v358
    %v369 = vpack.c.b16 %v361, %v360
    %378 = vmatpush.bf16.msra.mxu0 %v369
    %379 = vmatpush.bf16.msra.mxu0 %v368
    %380 = vmatpush.bf16.msra.mxu0 %v367
    %381 = vmatpush.bf16.msra.mxu0 %v366
    %382 = vmatpush.bf16.msra.mxu0 %v365
    %383 = vmatpush.bf16.msra.mxu0 %v364
    %384 = vmatpush.bf16.msra.mxu0 %v363
    %385 = vmatpush.bf16.msra.mxu0 %v362
    %386 = vmatmul.bf16.gmra.mxu0 %v309
    %v387 = vpop.f32.mrf.mxu0
    %v388 = vadd.f32 %v328, %v387
    %v389 = vpop.f32.mrf.mxu0
    %390 = vdwg.mxu0
    %v391 = vmax.f32 %v388, 0.0
    %v392 = vpack.c.bf16 %v391, %v391
    %v393 = vld [vmem:[#allocation11] sm:$0xf]
    %v394 = vld [vmem:[#allocation11 + $0x4] sm:$0xf]
    %v395 = vld [vmem:[#allocation11 + $0x8] sm:$0xf]
    %v396 = vld [vmem:[#allocation11 + $0xc] sm:$0xf]
    %v397 = vld [vmem:[#allocation11 + $0x10] sm:$0xf]
    %v398 = vld [vmem:[#allocation11 + $0x14] sm:$0xf]
    %v399 = vld [vmem:[#allocation11 + $0x18] sm:$0xf]
    %v400 = vld [vmem:[#allocation11 + $0x1c] sm:$0xf]
    %v401 = vld [vmem:[#allocation11 + $0x20] sm:$0xf]
    %v402 = vld [vmem:[#allocation11 + $0x24] sm:$0xf]
    %v403 = vld [vmem:[#allocation11 + $0x28] sm:$0xf]
    %v404 = vld [vmem:[#allocation11 + $0x2c] sm:$0xf]
    %v405 = vld [vmem:[#allocation11 + $0x30] sm:$0xf]
    %v406 = vld [vmem:[#allocation11 + $0x34] sm:$0xf]
    %v407 = vld [vmem:[#allocation11 + $0x38] sm:$0xf]
    %v408 = vld [vmem:[#allocation11 + $0x3c] sm:$0xf]
    %v409 = vld [vmem:[%s9] sm:$0x1]
    %v411 = vperm.slane %v409, 0
    %v429 = vunpack.c.l.b16 %v393
    %v430 = vunpack.c.l.b16 %v394
    %v431 = vunpack.c.l.b16 %v395
    %v432 = vunpack.c.l.b16 %v396
    %v433 = vunpack.c.l.b16 %v397
    %v434 = vunpack.c.l.b16 %v398
    %v435 = vunpack.c.l.b16 %v399
    %v436 = vunpack.c.l.b16 %v400
    %v437 = vunpack.c.l.b16 %v401
    %v438 = vunpack.c.l.b16 %v402
    %v439 = vunpack.c.l.b16 %v403
    %v440 = vunpack.c.l.b16 %v404
    %v441 = vunpack.c.l.b16 %v405
    %v442 = vunpack.c.l.b16 %v406
    %v443 = vunpack.c.l.b16 %v407
    %v444 = vunpack.c.l.b16 %v408
    %v445 = vpack.c.b16 %v430, %v429
    %v446 = vpack.c.b16 %v432, %v431
    %v447 = vpack.c.b16 %v434, %v433
    %v448 = vpack.c.b16 %v436, %v435
    %v449 = vpack.c.b16 %v438, %v437
    %v450 = vpack.c.b16 %v440, %v439
    %v451 = vpack.c.b16 %v442, %v441
    %v452 = vpack.c.b16 %v444, %v443
    %461 = vmatpush.bf16.msra.mxu0 %v452
    %462 = vmatpush.bf16.msra.mxu0 %v451
    %463 = vmatpush.bf16.msra.mxu0 %v450
    %464 = vmatpush.bf16.msra.mxu0 %v449
    %465 = vmatpush.bf16.msra.mxu0 %v448
    %466 = vmatpush.bf16.msra.mxu0 %v447
    %467 = vmatpush.bf16.msra.mxu0 %v446
    %468 = vmatpush.bf16.msra.mxu0 %v445
    %469 = vmatmul.bf16.gmra.mxu0 %v392
    %v470 = vpop.f32.mrf.mxu0
    %v471 = vadd.f32 %v411, %v470
    %v472 = vpop.f32.mrf.mxu0
    %473 = vdwg.mxu0
    %v474 = vadd.f32 %v471, %v142
    %475 = vadd.xlane.f32.xlu0 %v308
    %v476 = vpop.xlane.xlu0 %475
    %477 = vadd.xlane.f32.xlu0 %v474
    %v478 = vpop.xlane.xlu0 %477
    %v479 = vadd.f32 %v476, %v478
    %v480 = vmul.f32 %v479, 0.03125
    %v481 = vsub.f32 %v308, %v480
    %v482 = vsub.f32 %v474, %v480
    %v483 = vmul.f32 %v481, %v481
    %484 = vadd.xlane.f32.xlu0 %v483
    %v485 = vpop.xlane.xlu0 %484
    %v486 = vmul.f32 %v482, %v482
    %487 = vadd.xlane.f32.xlu0 %v486
    %v488 = vpop.xlane.xlu0 %487
    %v489 = vadd.f32 %v485, %v488
    %v490 = vmul.f32 %v480, %v480
    %v491 = vmul.f32 %v490, 224.0
    %v492 = vsub.f32 %v489, %v491
    %v493 = vmul.f32 %v492, 0.032258064
    %v494 = vrsqrt.pop %v493
    %v495 = vmul.f32 %v494, %v493
    %v496 = vmul.f32 %v495, %v494
    %v497 = vmul.f32 0.5, %v496
    %v498 = vsub.f32 1.5, %v497
    %v499 = vmul.f32 %v494, %v498
    %v500 = vmul.f32 %v493, %v499
    %vm501 = vcmp.eq.f32.partialorder %v493, inf
    %v502 = vsel %vm501, %v493, %v500
    %vm503 = vcmp.eq.f32.partialorder %v493, 0.0
    %v504 = vand.u32 %v493, 2147483648
    %v505 = vsel %vm503, %v504, %v502
    %v506 = vadd.f32 %v505, 0.001
    %v507 = vrcp.pop %v506
    %v508 = vmul.f32 %v506, %v507
    %v509 = vsub.f32 2.0, %v508
    %v510 = vmul.f32 %v507, %v509
    %v511 = vmul.f32 %v481, %v510
    %v512 = vld [vmem:[%s10] sm:$0x1]
    %v514 = vperm.slane %v512, 0
    %v516 = vmul.f32 %v511, %v514
    %v517 = vld [vmem:[%s11] sm:$0x1]
    %v519 = vperm.slane %v517, 0
    %v521 = vadd.f32 %v516, %v519
    %522 = vst [vmem:[#allocation13] sm:$0xff] %v521
    %v523 = vmul.f32 %v482, %v510
    %v524 = vld [vmem:[%s12] sm:$0x1]
    %v526 = vperm.slane %v524, 0
    %v528 = vmul.f32 %v523, %v526
    %v529 = vld [vmem:[%s13] sm:$0x1]
    %v531 = vperm.slane %v529, 0
    %v533 = vadd.f32 %v528, %v531
    %534 = vst [vmem:[#allocation14] sm:$0xff] %v533
    // Predicated region
    $region82: #{tpu_custom_call.1} parent=1 // pred_check
      _
    $region83: #{tpu_custom_call.1} parent=1 // pred_check_branch
      %536 = sbr.rel (0) target = $region85
    $region84: #{tpu_custom_call.1} parent=1 // pred_region
      %538 = vsyncadd [#allocation4], 0
      %s540 = sshll.u32 [#allocation13], 4
      %s541 = int_to_ptr.vmem [resolvable:$true] %s540
      %s542 = sshll.u32 %s14, 4
      %s543 = int_to_ptr.hbm [resolvable:$true] %s542
      %545 = dma.vmem_to_hbm [thread:$0]  %s541, 128, %s543, [#allocation4]
    $region85: #{tpu_custom_call.1} parent=1 // pred_fallthru
      _
    // Predicated region
    $region86: #{tpu_custom_call.1} parent=1 // pred_check
      _
    $region87: #{tpu_custom_call.1} parent=1 // pred_check_branch
      %547 = sbr.rel (0) target = $region89
    $region88: #{tpu_custom_call.1} parent=1 // pred_region
      %549 = vsyncadd [#allocation15], 0
      %s551 = sshll.u32 [#allocation14], 4
      %s552 = int_to_ptr.vmem [resolvable:$true] %s551
      %s553 = sshll.u32 %s15, 4
      %s554 = int_to_ptr.hbm [resolvable:$true] %s553
      %556 = dma.vmem_to_hbm [thread:$0]  %s552, 128, %s554, [#allocation15]
    $region89: #{tpu_custom_call.1} parent=1 // pred_fallthru
      _
    // Predicated region
    $region90: #{tpu_custom_call.1} parent=1 // pred_check
      _
    $region91: #{tpu_custom_call.1} parent=1 // pred_check_branch
      %558 = sbr.rel (0) target = $region93
    $region92: #{tpu_custom_call.1} parent=1 // pred_region
      %560 = dma.done [#allocation4], 128
    $region93: #{tpu_custom_call.1} parent=1 // pred_fallthru
      _
    // Predicated region
    $region94: #{tpu_custom_call.1} parent=1 // pred_check
      _
    $region95: #{tpu_custom_call.1} parent=1 // pred_check_branch
      %562 = sbr.rel (0) target = $region97
    $region96: #{tpu_custom_call.1} parent=1 // pred_region
      %564 = dma.done [#allocation15], 128
    $region97: #{tpu_custom_call.1} parent=1 // pred_fallthru
      _
    %565 = vsyncpa [#allocation3], 1
    %566 = vsyncpa [#allocation6], 1
    %567 = vsyncpa [#allocation9], 1
    %568 = vsyncpa [#allocation12], 1
    %569 = vsyncpa [#allocation4], 1
    %570 = vsyncpa [#allocation15], 1

</llo_original>
